<compile_context>
chip_gen: v5e
topology: v5e:2x2
jax: 0.10.0
libtpu: 0.0.40
codegen_flags: <defaults>
</compile_context>

<pallas_src>
import math

import jax
import jax.numpy as jnp
import numpy as np
from jax.experimental import pallas as pl
from jax.experimental.pallas import tpu as pltpu


# ----------------------------------------------------------------------------
# Fused Pallas kernel: all conv layers + BN + activations in one invocation
# ----------------------------------------------------------------------------
def _make_fused_kernel(layer_is_last, kk, eps, negative_slope):
    """Builds the fused kernel body.

    Ref layout (positional):
      refs[0]        layer-0 im2col patches   [M0, k*k*Cin]      (bf16)
      refs[1]        layer-0 weight matrix    [k*k*Cin, C1]      (bf16)
      refs[2 + 2l]   layer-(l+1) selection    [kk, M_out, M_in]  (bf16, 0/1)
      refs[3 + 2l]   layer-(l+1) weights      [kk, Cin, Cout]    (bf16)
                     (final layer: [kk, 1, Cin] row-vectors, Cout == 1)
      refs[-1]       output                   [N, 1]             (f32)
    """
    n_tail = len(layer_is_last)

    def kernel(*refs):
        p0_ref, w0_ref = refs[0], refs[1]
        o_ref = refs[2 + 2 * n_tail]

        # ---- layer 0: input conv (patches @ W) + LeakyReLU ------------------
        y = jnp.dot(p0_ref[...], w0_ref[...],
                    preferred_element_type=jnp.float32)
        y = jnp.where(y >= 0, y, negative_slope * y)

        # ---- subsequent layers: conv via per-tap selection matmuls ----------
        for li in range(n_tail):
            sel_ref = refs[2 + 2 * li]     # [kk, M_out, M_in]
            w_ref = refs[3 + 2 * li]
            yb = y.astype(jnp.bfloat16)    # bf16 operands for the MXU
            m_out = sel_ref.shape[1]

            if layer_is_last[li]:
                # Output conv (Cout == 1): multiply by row-vector weights and
                # lane-reduce (avoids a 1-lane matmul), then sigmoid.
                cin = w_ref.shape[2]
                acc = jnp.zeros((m_out, cin), jnp.float32)
                for b in range(kk):
                    patch_b = jnp.dot(sel_ref[b], yb,
                                      preferred_element_type=jnp.float32)
                    acc = acc + patch_b * w_ref[b].astype(jnp.float32)
                logits = jnp.sum(acc, axis=1, keepdims=True)       # [N, 1]
                o_ref[...] = jax.nn.sigmoid(logits).astype(o_ref.dtype)
            else:
                # Encoder conv + training-mode BatchNorm2d + LeakyReLU.
                cout = w_ref.shape[2]
                acc = jnp.zeros((m_out, cout), jnp.float32)
                for b in range(kk):
                    patch_b = jnp.dot(sel_ref[b], yb,
                                      preferred_element_type=jnp.float32)
                    acc = acc + jnp.dot(patch_b.astype(jnp.bfloat16), w_ref[b],
                                        preferred_element_type=jnp.float32)
                mean = jnp.mean(acc, axis=0, keepdims=True)
                var = jnp.mean((acc - mean) ** 2, axis=0, keepdims=True)
                y = (acc - mean) * jax.lax.rsqrt(var + eps)
                y = jnp.where(y >= 0, y, negative_slope * y)

    return kernel


# ----------------------------------------------------------------------------
# Host-side helpers (static slices only — no gathers)
# ----------------------------------------------------------------------------
def _im2col_first_layer(x_nhwc, k, stride, pad):
    """x: [N, H, W, C] -> patches [N*Ho*Wo, k*k*C], lanes ordered (kh, kw, c)."""
    N, H, W, C = x_nhwc.shape
    xp = jnp.pad(x_nhwc, ((0, 0), (pad, pad), (pad, pad), (0, 0)))
    Ho = (H + 2 * pad - k) // stride + 1
    Wo = (W + 2 * pad - k) // stride + 1
    cols = []
    for kh in range(k):
        for kw in range(k):
            cols.append(xp[:, kh: kh + (Ho - 1) * stride + 1: stride,
                           kw: kw + (Wo - 1) * stride + 1: stride, :])
    patches = jnp.concatenate(cols, axis=-1)            # [N, Ho, Wo, k*k*C]
    return patches.reshape(N * Ho * Wo, k * k * C), Ho, Wo


def _build_selection(n, hi, wi, ho, wo, k, stride, pad):
    """sel[b=(kh*k+kw), r_out, r_in] = 1 iff conv tap (kh, kw) at output row
    r_out reads input row r_in (out-of-bounds/padding -> all-zero row)."""
    sel = np.zeros((k * k, n * ho * wo, n * hi * wi), np.float32)
    for kh in range(k):
        for kw in range(k):
            b = kh * k + kw
            for ni in range(n):
                for oh in range(ho):
                    ih = oh * stride - pad + kh
                    if ih < 0 or ih >= hi:
                        continue
                    for ow in range(wo):
                        iw = ow * stride - pad + kw
                        if iw < 0 or iw >= wi:
                            continue
                        sel[b, (ni * ho + oh) * wo + ow,
                            (ni * hi + ih) * wi + iw] = 1.0
    return sel


# ----------------------------------------------------------------------------
# Discriminator: parameter construction + fused forward builder
# ----------------------------------------------------------------------------
def init_discriminator_params(key, image_size=16, density=8, channels=3,
                              std=0.02):
    depth = math.log2(image_size)
    assert depth == round(depth) and depth >= 3
    depth = int(depth)

    shapes = [(density, channels, 4, 4)]                       # input conv
    for layer in range(depth - 3):                             # encoder convs
        shapes.append((density * 2 ** (layer + 1), density * 2 ** layer, 4, 4))
    shapes.append((1, density * 2 ** (depth - 3), 4, 4))       # output conv

    keys = jax.random.split(key, len(shapes))
    params = [std * jax.random.normal(k, s, dtype=jnp.float32)
              for k, s in zip(keys, shapes)]
    return params, depth


def make_discriminator_forward(params, batch, image_size, *,
                               eps=1e-5, negative_slope=0.2):
    """Precomputes (batch-specialized) weight/selection operands and returns a
    jitted forward: x [N, C, H, W] f32 -> [N, 1] f32 (sigmoid scores)."""
    k = 4
    n_layers = len(params)
    channels = params[0].shape[1]

    # --- layer 0 (input conv): host im2col feeds the fused kernel -----------
    c1 = params[0].shape[0]
    stride0, pad0 = 2, 1
    h0 = (image_size + 2 * pad0 - k) // stride0 + 1
    # (kh, kw, cin, cout) flattening matches the patch lane order (kh, kw, cin)
    w0_mat = jnp.asarray(
        jnp.transpose(params[0], (2, 3, 1, 0)).reshape(k * k * channels, c1),
        jnp.bfloat16)

    # --- subsequent layers: selection blocks + per-tap weight blocks --------
    static_args = [w0_mat]
    layer_is_last = []
    hi, cin = h0, c1
    for li in range(1, n_layers):
        w = np.asarray(params[li])
        cout = w.shape[0]
        last = li == n_layers - 1
        stride, pad = (1, 0) if last else (2, 1)
        ho = (hi + 2 * pad - k) // stride + 1
        sel = _build_selection(batch, hi, hi, ho, ho, k, stride, pad)
        if last:
            assert cout == 1
            wblk = np.transpose(w, (2, 3, 0, 1)).reshape(k * k, 1, cin)
        else:
            wblk = np.transpose(w, (2, 3, 1, 0)).reshape(k * k, cin, cout)
        static_args.append(jnp.asarray(sel, jnp.bfloat16))
        static_args.append(jnp.asarray(wblk, jnp.bfloat16))
        layer_is_last.append(last)
        hi, cin = ho, cout

    kernel = _make_fused_kernel(tuple(layer_is_last), k * k, eps,
                                negative_slope)
    out_shape = jax.ShapeDtypeStruct((batch, 1), jnp.float32)

    def _full_spec(arr):
        nd = arr.ndim
        return pl.BlockSpec(arr.shape, lambda i, _nd=nd: (0,) * _nd)

    @jax.jit
    def forward(x_nchw):
        x_nhwc = jnp.transpose(x_nchw, (0, 2, 3, 1))      # channels-last once
        p0, _, _ = _im2col_first_layer(x_nhwc, k, stride0, pad0)
        args = [p0.astype(jnp.bfloat16)] + static_args
        return pl.pallas_call(
            kernel,
            out_shape=out_shape,
            grid=(1,),
            in_specs=[_full_spec(a) for a in args],
            out_specs=pl.BlockSpec((batch, 1), lambda i: (0, 0)),
            compiler_params=pltpu.CompilerParams(
                dimension_semantics=("arbitrary",)),
        )(*args)

    return forward


# ----------------------------------------------------------------------------
# Pure-JAX reference (lax.conv) for a fidelity check
# ----------------------------------------------------------------------------
def _reference_forward(params, x, eps=1e-5, negative_slope=0.2):
    n_layers = len(params)
    for li, w in enumerate(params):
        last = li == n_layers - 1
        stride, pad = (1, 0) if last else (2, 1)
        x = jax.lax.conv_general_dilated(
            x, w, (stride, stride), [(pad, pad), (pad, pad)],
            dimension_numbers=("NCHW", "OIHW", "NCHW"))
        if last:
            return jax.nn.sigmoid(x).reshape(x.shape[0], 1)
        if li > 0:   # training-mode BatchNorm2d (batch stats, gamma=1, beta=0)
            mean = jnp.mean(x, axis=(0, 2, 3), keepdims=True)
            var = jnp.mean((x - mean) ** 2, axis=(0, 2, 3), keepdims=True)
            x = (x - mean) * jax.lax.rsqrt(var + eps)
        x = jnp.where(x >= 0, x, negative_slope * x)


if __name__ == "__main__":
    key = jax.random.PRNGKey(0)
    k_param, k_input = jax.random.split(key)

    image_size, density, channels, batch = 16, 8, 3, 2
    params, _depth = init_discriminator_params(
        k_param, image_size=image_size, density=density, channels=channels)

    x = jax.random.normal(
        k_input, (batch, channels, image_size, image_size), dtype=jnp.float32)

    forward = make_discriminator_forward(params, batch, image_size)
    out = jax.block_until_ready(forward(x))

    assert out.shape == (batch, 1), out.shape
    assert bool(jnp.all((out >= 0.0) & (out <= 1.0))), "sigmoid range violated"

    ref = _reference_forward(params, x)
    max_err = float(jnp.max(jnp.abs(out - ref)))
    assert max_err < 5e-2, f"mismatch vs reference: max abs err {max_err}"

    print("KERNEL_OK")
</pallas_src>

<mosaic_0001>
module attributes {stable_mosaic.version = 11 : i64} {
  func.func @kernel(%arg0: i32, %arg1: memref<128x48xbf16, #tpu.memory_space<vmem>>, %arg2: memref<48x8xbf16, #tpu.memory_space<vmem>>, %arg3: memref<16x32x128xbf16, #tpu.memory_space<vmem>>, %arg4: memref<16x8x16xbf16, #tpu.memory_space<vmem>>, %arg5: memref<16x2x32xbf16, #tpu.memory_space<vmem>>, %arg6: memref<16x1x16xbf16, #tpu.memory_space<vmem>>, %arg7: memref<2x1xf32, #tpu.memory_space<vmem>>) attributes {dimension_semantics = [#tpu.dimension_semantics<arbitrary>], iteration_bounds = array<i64: 1>, scalar_prefetch = 0 : i64, scratch_operands = 0 : i64, tpu.core_type = #tpu.core_type<tc>, window_params = [{pipeline_mode = #tpu.pipeline_mode<synchronous>, transform_indices = @transform_0, window_bounds = array<i64: 128, 48>}, {pipeline_mode = #tpu.pipeline_mode<synchronous>, transform_indices = @transform_1, window_bounds = array<i64: 48, 8>}, {pipeline_mode = #tpu.pipeline_mode<synchronous>, transform_indices = @transform_2, window_bounds = array<i64: 16, 32, 128>}, {pipeline_mode = #tpu.pipeline_mode<synchronous>, transform_indices = @transform_3, window_bounds = array<i64: 16, 8, 16>}, {pipeline_mode = #tpu.pipeline_mode<synchronous>, transform_indices = @transform_4, window_bounds = array<i64: 16, 2, 32>}, {pipeline_mode = #tpu.pipeline_mode<synchronous>, transform_indices = @transform_5, window_bounds = array<i64: 16, 1, 16>}, {pipeline_mode = #tpu.pipeline_mode<synchronous>, transform_indices = @transform_6, window_bounds = array<i64: 2, 1>}]} {
    %c0 = arith.constant 0 : index
    %c0_0 = arith.constant 0 : index
    %0 = vector.load %arg1[%c0, %c0_0] : memref<128x48xbf16, #tpu.memory_space<vmem>>, vector<128x48xbf16>
    %c0_1 = arith.constant 0 : index
    %c0_2 = arith.constant 0 : index
    %1 = vector.load %arg2[%c0_1, %c0_2] : memref<48x8xbf16, #tpu.memory_space<vmem>>, vector<48x8xbf16>
    %cst = arith.constant dense<0.000000e+00> : vector<128x8xf32>
    %2 = tpu.matmul %0, %1, %cst {dimension_numbers = #tpu.dot_dimension_numbers<[1], [0], [0], [1], [0, 0, 1, 1], [], []>} : vector<128x48xbf16>, vector<48x8xbf16>, vector<128x8xf32> -> vector<128x8xf32>
    %cst_3 = arith.constant 0.000000e+00 : f32
    %3 = vector.broadcast %cst_3 : f32 to vector<128x8xf32>
    %4 = arith.cmpf oge, %2, %3 : vector<128x8xf32>
    %cst_4 = arith.constant 2.000000e-01 : f32
    %5 = vector.broadcast %cst_4 : f32 to vector<128x8xf32>
    %6 = arith.mulf %5, %2 : vector<128x8xf32>
    %7 = arith.select %4, %2, %6 : vector<128x8xi1>, vector<128x8xf32>
    %8 = arith.truncf %7 : vector<128x8xf32> to vector<128x8xbf16>
    %cst_5 = arith.constant 0.000000e+00 : f32
    %9 = vector.broadcast %cst_5 : f32 to vector<32x16xf32>
    %c0_6 = arith.constant 0 : index
    %c0_7 = arith.constant 0 : index
    %c0_8 = arith.constant 0 : index
    %10 = vector.load %arg3[%c0_6, %c0_7, %c0_8] : memref<16x32x128xbf16, #tpu.memory_space<vmem>>, vector<1x32x128xbf16>
    %11 = vector.shape_cast %10 : vector<1x32x128xbf16> to vector<32x128xbf16>
    %cst_9 = arith.constant dense<0.000000e+00> : vector<32x8xf32>
    %12 = tpu.matmul %11, %8, %cst_9 {dimension_numbers = #tpu.dot_dimension_numbers<[1], [0], [0], [1], [0, 0, 1, 1], [], []>} : vector<32x128xbf16>, vector<128x8xbf16>, vector<32x8xf32> -> vector<32x8xf32>
    %13 = arith.truncf %12 : vector<32x8xf32> to vector<32x8xbf16>
    %c0_10 = arith.constant 0 : index
    %c0_11 = arith.constant 0 : index
    %c0_12 = arith.constant 0 : index
    %14 = vector.load %arg4[%c0_10, %c0_11, %c0_12] : memref<16x8x16xbf16, #tpu.memory_space<vmem>>, vector<1x8x16xbf16>
    %15 = vector.shape_cast %14 : vector<1x8x16xbf16> to vector<8x16xbf16>
    %cst_13 = arith.constant dense<0.000000e+00> : vector<32x16xf32>
    %16 = tpu.matmul %13, %15, %cst_13 {dimension_numbers = #tpu.dot_dimension_numbers<[1], [0], [0], [1], [0, 0, 1, 1], [], []>} : vector<32x8xbf16>, vector<8x16xbf16>, vector<32x16xf32> -> vector<32x16xf32>
    %17 = arith.addf %9, %16 : vector<32x16xf32>
    %c1 = arith.constant 1 : index
    %c0_14 = arith.constant 0 : index
    %c0_15 = arith.constant 0 : index
    %18 = vector.load %arg3[%c1, %c0_14, %c0_15] : memref<16x32x128xbf16, #tpu.memory_space<vmem>>, vector<1x32x128xbf16>
    %19 = vector.shape_cast %18 : vector<1x32x128xbf16> to vector<32x128xbf16>
    %cst_16 = arith.constant dense<0.000000e+00> : vector<32x8xf32>
    %20 = tpu.matmul %19, %8, %cst_16 {dimension_numbers = #tpu.dot_dimension_numbers<[1], [0], [0], [1], [0, 0, 1, 1], [], []>} : vector<32x128xbf16>, vector<128x8xbf16>, vector<32x8xf32> -> vector<32x8xf32>
    %21 = arith.truncf %20 : vector<32x8xf32> to vector<32x8xbf16>
    %c1_17 = arith.constant 1 : index
    %c0_18 = arith.constant 0 : index
    %c0_19 = arith.constant 0 : index
    %22 = vector.load %arg4[%c1_17, %c0_18, %c0_19] : memref<16x8x16xbf16, #tpu.memory_space<vmem>>, vector<1x8x16xbf16>
    %23 = vector.shape_cast %22 : vector<1x8x16xbf16> to vector<8x16xbf16>
    %cst_20 = arith.constant dense<0.000000e+00> : vector<32x16xf32>
    %24 = tpu.matmul %21, %23, %cst_20 {dimension_numbers = #tpu.dot_dimension_numbers<[1], [0], [0], [1], [0, 0, 1, 1], [], []>} : vector<32x8xbf16>, vector<8x16xbf16>, vector<32x16xf32> -> vector<32x16xf32>
    %25 = arith.addf %17, %24 : vector<32x16xf32>
    %c2 = arith.constant 2 : index
    %c0_21 = arith.constant 0 : index
    %c0_22 = arith.constant 0 : index
    %26 = vector.load %arg3[%c2, %c0_21, %c0_22] : memref<16x32x128xbf16, #tpu.memory_space<vmem>>, vector<1x32x128xbf16>
    %27 = vector.shape_cast %26 : vector<1x32x128xbf16> to vector<32x128xbf16>
    %cst_23 = arith.constant dense<0.000000e+00> : vector<32x8xf32>
    %28 = tpu.matmul %27, %8, %cst_23 {dimension_numbers = #tpu.dot_dimension_numbers<[1], [0], [0], [1], [0, 0, 1, 1], [], []>} : vector<32x128xbf16>, vector<128x8xbf16>, vector<32x8xf32> -> vector<32x8xf32>
    %29 = arith.truncf %28 : vector<32x8xf32> to vector<32x8xbf16>
    %c2_24 = arith.constant 2 : index
    %c0_25 = arith.constant 0 : index
    %c0_26 = arith.constant 0 : index
    %30 = vector.load %arg4[%c2_24, %c0_25, %c0_26] : memref<16x8x16xbf16, #tpu.memory_space<vmem>>, vector<1x8x16xbf16>
    %31 = vector.shape_cast %30 : vector<1x8x16xbf16> to vector<8x16xbf16>
    %cst_27 = arith.constant dense<0.000000e+00> : vector<32x16xf32>
    %32 = tpu.matmul %29, %31, %cst_27 {dimension_numbers = #tpu.dot_dimension_numbers<[1], [0], [0], [1], [0, 0, 1, 1], [], []>} : vector<32x8xbf16>, vector<8x16xbf16>, vector<32x16xf32> -> vector<32x16xf32>
    %33 = arith.addf %25, %32 : vector<32x16xf32>
    %c3 = arith.constant 3 : index
    %c0_28 = arith.constant 0 : index
    %c0_29 = arith.constant 0 : index
    %34 = vector.load %arg3[%c3, %c0_28, %c0_29] : memref<16x32x128xbf16, #tpu.memory_space<vmem>>, vector<1x32x128xbf16>
    %35 = vector.shape_cast %34 : vector<1x32x128xbf16> to vector<32x128xbf16>
    %cst_30 = arith.constant dense<0.000000e+00> : vector<32x8xf32>
    %36 = tpu.matmul %35, %8, %cst_30 {dimension_numbers = #tpu.dot_dimension_numbers<[1], [0], [0], [1], [0, 0, 1, 1], [], []>} : vector<32x128xbf16>, vector<128x8xbf16>, vector<32x8xf32> -> vector<32x8xf32>
    %37 = arith.truncf %36 : vector<32x8xf32> to vector<32x8xbf16>
    %c3_31 = arith.constant 3 : index
    %c0_32 = arith.constant 0 : index
    %c0_33 = arith.constant 0 : index
    %38 = vector.load %arg4[%c3_31, %c0_32, %c0_33] : memref<16x8x16xbf16, #tpu.memory_space<vmem>>, vector<1x8x16xbf16>
    %39 = vector.shape_cast %38 : vector<1x8x16xbf16> to vector<8x16xbf16>
    %cst_34 = arith.constant dense<0.000000e+00> : vector<32x16xf32>
    %40 = tpu.matmul %37, %39, %cst_34 {dimension_numbers = #tpu.dot_dimension_numbers<[1], [0], [0], [1], [0, 0, 1, 1], [], []>} : vector<32x8xbf16>, vector<8x16xbf16>, vector<32x16xf32> -> vector<32x16xf32>
    %41 = arith.addf %33, %40 : vector<32x16xf32>
    %c4 = arith.constant 4 : index
    %c0_35 = arith.constant 0 : index
    %c0_36 = arith.constant 0 : index
    %42 = vector.load %arg3[%c4, %c0_35, %c0_36] : memref<16x32x128xbf16, #tpu.memory_space<vmem>>, vector<1x32x128xbf16>
    %43 = vector.shape_cast %42 : vector<1x32x128xbf16> to vector<32x128xbf16>
    %cst_37 = arith.constant dense<0.000000e+00> : vector<32x8xf32>
    %44 = tpu.matmul %43, %8, %cst_37 {dimension_numbers = #tpu.dot_dimension_numbers<[1], [0], [0], [1], [0, 0, 1, 1], [], []>} : vector<32x128xbf16>, vector<128x8xbf16>, vector<32x8xf32> -> vector<32x8xf32>
    %45 = arith.truncf %44 : vector<32x8xf32> to vector<32x8xbf16>
    %c4_38 = arith.constant 4 : index
    %c0_39 = arith.constant 0 : index
    %c0_40 = arith.constant 0 : index
    %46 = vector.load %arg4[%c4_38, %c0_39, %c0_40] : memref<16x8x16xbf16, #tpu.memory_space<vmem>>, vector<1x8x16xbf16>
    %47 = vector.shape_cast %46 : vector<1x8x16xbf16> to vector<8x16xbf16>
    %cst_41 = arith.constant dense<0.000000e+00> : vector<32x16xf32>
    %48 = tpu.matmul %45, %47, %cst_41 {dimension_numbers = #tpu.dot_dimension_numbers<[1], [0], [0], [1], [0, 0, 1, 1], [], []>} : vector<32x8xbf16>, vector<8x16xbf16>, vector<32x16xf32> -> vector<32x16xf32>
    %49 = arith.addf %41, %48 : vector<32x16xf32>
    %c5 = arith.constant 5 : index
    %c0_42 = arith.constant 0 : index
    %c0_43 = arith.constant 0 : index
    %50 = vector.load %arg3[%c5, %c0_42, %c0_43] : memref<16x32x128xbf16, #tpu.memory_space<vmem>>, vector<1x32x128xbf16>
    %51 = vector.shape_cast %50 : vector<1x32x128xbf16> to vector<32x128xbf16>
    %cst_44 = arith.constant dense<0.000000e+00> : vector<32x8xf32>
    %52 = tpu.matmul %51, %8, %cst_44 {dimension_numbers = #tpu.dot_dimension_numbers<[1], [0], [0], [1], [0, 0, 1, 1], [], []>} : vector<32x128xbf16>, vector<128x8xbf16>, vector<32x8xf32> -> vector<32x8xf32>
    %53 = arith.truncf %52 : vector<32x8xf32> to vector<32x8xbf16>
    %c5_45 = arith.constant 5 : index
    %c0_46 = arith.constant 0 : index
    %c0_47 = arith.constant 0 : index
    %54 = vector.load %arg4[%c5_45, %c0_46, %c0_47] : memref<16x8x16xbf16, #tpu.memory_space<vmem>>, vector<1x8x16xbf16>
    %55 = vector.shape_cast %54 : vector<1x8x16xbf16> to vector<8x16xbf16>
    %cst_48 = arith.constant dense<0.000000e+00> : vector<32x16xf32>
    %56 = tpu.matmul %53, %55, %cst_48 {dimension_numbers = #tpu.dot_dimension_numbers<[1], [0], [0], [1], [0, 0, 1, 1], [], []>} : vector<32x8xbf16>, vector<8x16xbf16>, vector<32x16xf32> -> vector<32x16xf32>
    %57 = arith.addf %49, %56 : vector<32x16xf32>
    %c6 = arith.constant 6 : index
    %c0_49 = arith.constant 0 : index
    %c0_50 = arith.constant 0 : index
    %58 = vector.load %arg3[%c6, %c0_49, %c0_50] : memref<16x32x128xbf16, #tpu.memory_space<vmem>>, vector<1x32x128xbf16>
    %59 = vector.shape_cast %58 : vector<1x32x128xbf16> to vector<32x128xbf16>
    %cst_51 = arith.constant dense<0.000000e+00> : vector<32x8xf32>
    %60 = tpu.matmul %59, %8, %cst_51 {dimension_numbers = #tpu.dot_dimension_numbers<[1], [0], [0], [1], [0, 0, 1, 1], [], []>} : vector<32x128xbf16>, vector<128x8xbf16>, vector<32x8xf32> -> vector<32x8xf32>
    %61 = arith.truncf %60 : vector<32x8xf32> to vector<32x8xbf16>
    %c6_52 = arith.constant 6 : index
    %c0_53 = arith.constant 0 : index
    %c0_54 = arith.constant 0 : index
    %62 = vector.load %arg4[%c6_52, %c0_53, %c0_54] : memref<16x8x16xbf16, #tpu.memory_space<vmem>>, vector<1x8x16xbf16>
    %63 = vector.shape_cast %62 : vector<1x8x16xbf16> to vector<8x16xbf16>
    %cst_55 = arith.constant dense<0.000000e+00> : vector<32x16xf32>
    %64 = tpu.matmul %61, %63, %cst_55 {dimension_numbers = #tpu.dot_dimension_numbers<[1], [0], [0], [1], [0, 0, 1, 1], [], []>} : vector<32x8xbf16>, vector<8x16xbf16>, vector<32x16xf32> -> vector<32x16xf32>
    %65 = arith.addf %57, %64 : vector<32x16xf32>
    %c7 = arith.constant 7 : index
    %c0_56 = arith.constant 0 : index
    %c0_57 = arith.constant 0 : index
    %66 = vector.load %arg3[%c7, %c0_56, %c0_57] : memref<16x32x128xbf16, #tpu.memory_space<vmem>>, vector<1x32x128xbf16>
    %67 = vector.shape_cast %66 : vector<1x32x128xbf16> to vector<32x128xbf16>
    %cst_58 = arith.constant dense<0.000000e+00> : vector<32x8xf32>
    %68 = tpu.matmul %67, %8, %cst_58 {dimension_numbers = #tpu.dot_dimension_numbers<[1], [0], [0], [1], [0, 0, 1, 1], [], []>} : vector<32x128xbf16>, vector<128x8xbf16>, vector<32x8xf32> -> vector<32x8xf32>
    %69 = arith.truncf %68 : vector<32x8xf32> to vector<32x8xbf16>
    %c7_59 = arith.constant 7 : index
    %c0_60 = arith.constant 0 : index
    %c0_61 = arith.constant 0 : index
    %70 = vector.load %arg4[%c7_59, %c0_60, %c0_61] : memref<16x8x16xbf16, #tpu.memory_space<vmem>>, vector<1x8x16xbf16>
    %71 = vector.shape_cast %70 : vector<1x8x16xbf16> to vector<8x16xbf16>
    %cst_62 = arith.constant dense<0.000000e+00> : vector<32x16xf32>
    %72 = tpu.matmul %69, %71, %cst_62 {dimension_numbers = #tpu.dot_dimension_numbers<[1], [0], [0], [1], [0, 0, 1, 1], [], []>} : vector<32x8xbf16>, vector<8x16xbf16>, vector<32x16xf32> -> vector<32x16xf32>
    %73 = arith.addf %65, %72 : vector<32x16xf32>
    %c8 = arith.constant 8 : index
    %c0_63 = arith.constant 0 : index
    %c0_64 = arith.constant 0 : index
    %74 = vector.load %arg3[%c8, %c0_63, %c0_64] : memref<16x32x128xbf16, #tpu.memory_space<vmem>>, vector<1x32x128xbf16>
    %75 = vector.shape_cast %74 : vector<1x32x128xbf16> to vector<32x128xbf16>
    %cst_65 = arith.constant dense<0.000000e+00> : vector<32x8xf32>
    %76 = tpu.matmul %75, %8, %cst_65 {dimension_numbers = #tpu.dot_dimension_numbers<[1], [0], [0], [1], [0, 0, 1, 1], [], []>} : vector<32x128xbf16>, vector<128x8xbf16>, vector<32x8xf32> -> vector<32x8xf32>
    %77 = arith.truncf %76 : vector<32x8xf32> to vector<32x8xbf16>
    %c8_66 = arith.constant 8 : index
    %c0_67 = arith.constant 0 : index
    %c0_68 = arith.constant 0 : index
    %78 = vector.load %arg4[%c8_66, %c0_67, %c0_68] : memref<16x8x16xbf16, #tpu.memory_space<vmem>>, vector<1x8x16xbf16>
    %79 = vector.shape_cast %78 : vector<1x8x16xbf16> to vector<8x16xbf16>
    %cst_69 = arith.constant dense<0.000000e+00> : vector<32x16xf32>
    %80 = tpu.matmul %77, %79, %cst_69 {dimension_numbers = #tpu.dot_dimension_numbers<[1], [0], [0], [1], [0, 0, 1, 1], [], []>} : vector<32x8xbf16>, vector<8x16xbf16>, vector<32x16xf32> -> vector<32x16xf32>
    %81 = arith.addf %73, %80 : vector<32x16xf32>
    %c9 = arith.constant 9 : index
    %c0_70 = arith.constant 0 : index
    %c0_71 = arith.constant 0 : index
    %82 = vector.load %arg3[%c9, %c0_70, %c0_71] : memref<16x32x128xbf16, #tpu.memory_space<vmem>>, vector<1x32x128xbf16>
    %83 = vector.shape_cast %82 : vector<1x32x128xbf16> to vector<32x128xbf16>
    %cst_72 = arith.constant dense<0.000000e+00> : vector<32x8xf32>
    %84 = tpu.matmul %83, %8, %cst_72 {dimension_numbers = #tpu.dot_dimension_numbers<[1], [0], [0], [1], [0, 0, 1, 1], [], []>} : vector<32x128xbf16>, vector<128x8xbf16>, vector<32x8xf32> -> vector<32x8xf32>
    %85 = arith.truncf %84 : vector<32x8xf32> to vector<32x8xbf16>
    %c9_73 = arith.constant 9 : index
    %c0_74 = arith.constant 0 : index
    %c0_75 = arith.constant 0 : index
    %86 = vector.load %arg4[%c9_73, %c0_74, %c0_75] : memref<16x8x16xbf16, #tpu.memory_space<vmem>>, vector<1x8x16xbf16>
    %87 = vector.shape_cast %86 : vector<1x8x16xbf16> to vector<8x16xbf16>
    %cst_76 = arith.constant dense<0.000000e+00> : vector<32x16xf32>
    %88 = tpu.matmul %85, %87, %cst_76 {dimension_numbers = #tpu.dot_dimension_numbers<[1], [0], [0], [1], [0, 0, 1, 1], [], []>} : vector<32x8xbf16>, vector<8x16xbf16>, vector<32x16xf32> -> vector<32x16xf32>
    %89 = arith.addf %81, %88 : vector<32x16xf32>
    %c10 = arith.constant 10 : index
    %c0_77 = arith.constant 0 : index
    %c0_78 = arith.constant 0 : index
    %90 = vector.load %arg3[%c10, %c0_77, %c0_78] : memref<16x32x128xbf16, #tpu.memory_space<vmem>>, vector<1x32x128xbf16>
    %91 = vector.shape_cast %90 : vector<1x32x128xbf16> to vector<32x128xbf16>
    %cst_79 = arith.constant dense<0.000000e+00> : vector<32x8xf32>
    %92 = tpu.matmul %91, %8, %cst_79 {dimension_numbers = #tpu.dot_dimension_numbers<[1], [0], [0], [1], [0, 0, 1, 1], [], []>} : vector<32x128xbf16>, vector<128x8xbf16>, vector<32x8xf32> -> vector<32x8xf32>
    %93 = arith.truncf %92 : vector<32x8xf32> to vector<32x8xbf16>
    %c10_80 = arith.constant 10 : index
    %c0_81 = arith.constant 0 : index
    %c0_82 = arith.constant 0 : index
    %94 = vector.load %arg4[%c10_80, %c0_81, %c0_82] : memref<16x8x16xbf16, #tpu.memory_space<vmem>>, vector<1x8x16xbf16>
    %95 = vector.shape_cast %94 : vector<1x8x16xbf16> to vector<8x16xbf16>
    %cst_83 = arith.constant dense<0.000000e+00> : vector<32x16xf32>
    %96 = tpu.matmul %93, %95, %cst_83 {dimension_numbers = #tpu.dot_dimension_numbers<[1], [0], [0], [1], [0, 0, 1, 1], [], []>} : vector<32x8xbf16>, vector<8x16xbf16>, vector<32x16xf32> -> vector<32x16xf32>
    %97 = arith.addf %89, %96 : vector<32x16xf32>
    %c11 = arith.constant 11 : index
    %c0_84 = arith.constant 0 : index
    %c0_85 = arith.constant 0 : index
    %98 = vector.load %arg3[%c11, %c0_84, %c0_85] : memref<16x32x128xbf16, #tpu.memory_space<vmem>>, vector<1x32x128xbf16>
    %99 = vector.shape_cast %98 : vector<1x32x128xbf16> to vector<32x128xbf16>
    %cst_86 = arith.constant dense<0.000000e+00> : vector<32x8xf32>
    %100 = tpu.matmul %99, %8, %cst_86 {dimension_numbers = #tpu.dot_dimension_numbers<[1], [0], [0], [1], [0, 0, 1, 1], [], []>} : vector<32x128xbf16>, vector<128x8xbf16>, vector<32x8xf32> -> vector<32x8xf32>
    %101 = arith.truncf %100 : vector<32x8xf32> to vector<32x8xbf16>
    %c11_87 = arith.constant 11 : index
    %c0_88 = arith.constant 0 : index
    %c0_89 = arith.constant 0 : index
    %102 = vector.load %arg4[%c11_87, %c0_88, %c0_89] : memref<16x8x16xbf16, #tpu.memory_space<vmem>>, vector<1x8x16xbf16>
    %103 = vector.shape_cast %102 : vector<1x8x16xbf16> to vector<8x16xbf16>
    %cst_90 = arith.constant dense<0.000000e+00> : vector<32x16xf32>
    %104 = tpu.matmul %101, %103, %cst_90 {dimension_numbers = #tpu.dot_dimension_numbers<[1], [0], [0], [1], [0, 0, 1, 1], [], []>} : vector<32x8xbf16>, vector<8x16xbf16>, vector<32x16xf32> -> vector<32x16xf32>
    %105 = arith.addf %97, %104 : vector<32x16xf32>
    %c12 = arith.constant 12 : index
    %c0_91 = arith.constant 0 : index
    %c0_92 = arith.constant 0 : index
    %106 = vector.load %arg3[%c12, %c0_91, %c0_92] : memref<16x32x128xbf16, #tpu.memory_space<vmem>>, vector<1x32x128xbf16>
    %107 = vector.shape_cast %106 : vector<1x32x128xbf16> to vector<32x128xbf16>
    %cst_93 = arith.constant dense<0.000000e+00> : vector<32x8xf32>
    %108 = tpu.matmul %107, %8, %cst_93 {dimension_numbers = #tpu.dot_dimension_numbers<[1], [0], [0], [1], [0, 0, 1, 1], [], []>} : vector<32x128xbf16>, vector<128x8xbf16>, vector<32x8xf32> -> vector<32x8xf32>
    %109 = arith.truncf %108 : vector<32x8xf32> to vector<32x8xbf16>
    %c12_94 = arith.constant 12 : index
    %c0_95 = arith.constant 0 : index
    %c0_96 = arith.constant 0 : index
    %110 = vector.load %arg4[%c12_94, %c0_95, %c0_96] : memref<16x8x16xbf16, #tpu.memory_space<vmem>>, vector<1x8x16xbf16>
    %111 = vector.shape_cast %110 : vector<1x8x16xbf16> to vector<8x16xbf16>
    %cst_97 = arith.constant dense<0.000000e+00> : vector<32x16xf32>
    %112 = tpu.matmul %109, %111, %cst_97 {dimension_numbers = #tpu.dot_dimension_numbers<[1], [0], [0], [1], [0, 0, 1, 1], [], []>} : vector<32x8xbf16>, vector<8x16xbf16>, vector<32x16xf32> -> vector<32x16xf32>
    %113 = arith.addf %105, %112 : vector<32x16xf32>
    %c13 = arith.constant 13 : index
    %c0_98 = arith.constant 0 : index
    %c0_99 = arith.constant 0 : index
    %114 = vector.load %arg3[%c13, %c0_98, %c0_99] : memref<16x32x128xbf16, #tpu.memory_space<vmem>>, vector<1x32x128xbf16>
    %115 = vector.shape_cast %114 : vector<1x32x128xbf16> to vector<32x128xbf16>
    %cst_100 = arith.constant dense<0.000000e+00> : vector<32x8xf32>
    %116 = tpu.matmul %115, %8, %cst_100 {dimension_numbers = #tpu.dot_dimension_numbers<[1], [0], [0], [1], [0, 0, 1, 1], [], []>} : vector<32x128xbf16>, vector<128x8xbf16>, vector<32x8xf32> -> vector<32x8xf32>
    %117 = arith.truncf %116 : vector<32x8xf32> to vector<32x8xbf16>
    %c13_101 = arith.constant 13 : index
    %c0_102 = arith.constant 0 : index
    %c0_103 = arith.constant 0 : index
    %118 = vector.load %arg4[%c13_101, %c0_102, %c0_103] : memref<16x8x16xbf16, #tpu.memory_space<vmem>>, vector<1x8x16xbf16>
    %119 = vector.shape_cast %118 : vector<1x8x16xbf16> to vector<8x16xbf16>
    %cst_104 = arith.constant dense<0.000000e+00> : vector<32x16xf32>
    %120 = tpu.matmul %117, %119, %cst_104 {dimension_numbers = #tpu.dot_dimension_numbers<[1], [0], [0], [1], [0, 0, 1, 1], [], []>} : vector<32x8xbf16>, vector<8x16xbf16>, vector<32x16xf32> -> vector<32x16xf32>
    %121 = arith.addf %113, %120 : vector<32x16xf32>
    %c14 = arith.constant 14 : index
    %c0_105 = arith.constant 0 : index
    %c0_106 = arith.constant 0 : index
    %122 = vector.load %arg3[%c14, %c0_105, %c0_106] : memref<16x32x128xbf16, #tpu.memory_space<vmem>>, vector<1x32x128xbf16>
    %123 = vector.shape_cast %122 : vector<1x32x128xbf16> to vector<32x128xbf16>
    %cst_107 = arith.constant dense<0.000000e+00> : vector<32x8xf32>
    %124 = tpu.matmul %123, %8, %cst_107 {dimension_numbers = #tpu.dot_dimension_numbers<[1], [0], [0], [1], [0, 0, 1, 1], [], []>} : vector<32x128xbf16>, vector<128x8xbf16>, vector<32x8xf32> -> vector<32x8xf32>
    %125 = arith.truncf %124 : vector<32x8xf32> to vector<32x8xbf16>
    %c14_108 = arith.constant 14 : index
    %c0_109 = arith.constant 0 : index
    %c0_110 = arith.constant 0 : index
    %126 = vector.load %arg4[%c14_108, %c0_109, %c0_110] : memref<16x8x16xbf16, #tpu.memory_space<vmem>>, vector<1x8x16xbf16>
    %127 = vector.shape_cast %126 : vector<1x8x16xbf16> to vector<8x16xbf16>
    %cst_111 = arith.constant dense<0.000000e+00> : vector<32x16xf32>
    %128 = tpu.matmul %125, %127, %cst_111 {dimension_numbers = #tpu.dot_dimension_numbers<[1], [0], [0], [1], [0, 0, 1, 1], [], []>} : vector<32x8xbf16>, vector<8x16xbf16>, vector<32x16xf32> -> vector<32x16xf32>
    %129 = arith.addf %121, %128 : vector<32x16xf32>
    %c15 = arith.constant 15 : index
    %c0_112 = arith.constant 0 : index
    %c0_113 = arith.constant 0 : index
    %130 = vector.load %arg3[%c15, %c0_112, %c0_113] : memref<16x32x128xbf16, #tpu.memory_space<vmem>>, vector<1x32x128xbf16>
    %131 = vector.shape_cast %130 : vector<1x32x128xbf16> to vector<32x128xbf16>
    %cst_114 = arith.constant dense<0.000000e+00> : vector<32x8xf32>
    %132 = tpu.matmul %131, %8, %cst_114 {dimension_numbers = #tpu.dot_dimension_numbers<[1], [0], [0], [1], [0, 0, 1, 1], [], []>} : vector<32x128xbf16>, vector<128x8xbf16>, vector<32x8xf32> -> vector<32x8xf32>
    %133 = arith.truncf %132 : vector<32x8xf32> to vector<32x8xbf16>
    %c15_115 = arith.constant 15 : index
    %c0_116 = arith.constant 0 : index
    %c0_117 = arith.constant 0 : index
    %134 = vector.load %arg4[%c15_115, %c0_116, %c0_117] : memref<16x8x16xbf16, #tpu.memory_space<vmem>>, vector<1x8x16xbf16>
    %135 = vector.shape_cast %134 : vector<1x8x16xbf16> to vector<8x16xbf16>
    %cst_118 = arith.constant dense<0.000000e+00> : vector<32x16xf32>
    %136 = tpu.matmul %133, %135, %cst_118 {dimension_numbers = #tpu.dot_dimension_numbers<[1], [0], [0], [1], [0, 0, 1, 1], [], []>} : vector<32x8xbf16>, vector<8x16xbf16>, vector<32x16xf32> -> vector<32x16xf32>
    %137 = arith.addf %129, %136 : vector<32x16xf32>
    %cst_119 = arith.constant dense<0.000000e+00> : vector<16xf32>
    %138 = vector.multi_reduction <add>, %137, %cst_119 [0] : vector<32x16xf32> to vector<16xf32>
    %139 = vector.shape_cast %138 : vector<16xf32> to vector<1x16xf32>
    %cst_120 = arith.constant 3.200000e+01 : f32
    %140 = vector.broadcast %cst_120 : f32 to vector<1x16xf32>
    %141 = arith.divf %139, %140 : vector<1x16xf32>
    %142 = vector.broadcast %141 : vector<1x16xf32> to vector<32x16xf32>
    %143 = arith.subf %137, %142 : vector<32x16xf32>
    %144 = arith.mulf %143, %143 : vector<32x16xf32>
    %cst_121 = arith.constant dense<0.000000e+00> : vector<16xf32>
    %145 = vector.multi_reduction <add>, %144, %cst_121 [0] : vector<32x16xf32> to vector<16xf32>
    %146 = vector.shape_cast %145 : vector<16xf32> to vector<1x16xf32>
    %cst_122 = arith.constant 3.200000e+01 : f32
    %147 = vector.broadcast %cst_122 : f32 to vector<1x16xf32>
    %148 = arith.divf %146, %147 : vector<1x16xf32>
    %149 = vector.broadcast %141 : vector<1x16xf32> to vector<32x16xf32>
    %150 = arith.subf %137, %149 : vector<32x16xf32>
    %cst_123 = arith.constant 9.99999974E-6 : f32
    %151 = vector.broadcast %cst_123 : f32 to vector<1x16xf32>
    %152 = arith.addf %148, %151 : vector<1x16xf32>
    %153 = math.rsqrt %152 : vector<1x16xf32>
    %154 = vector.broadcast %153 : vector<1x16xf32> to vector<32x16xf32>
    %155 = arith.mulf %150, %154 : vector<32x16xf32>
    %cst_124 = arith.constant 0.000000e+00 : f32
    %156 = vector.broadcast %cst_124 : f32 to vector<32x16xf32>
    %157 = arith.cmpf oge, %155, %156 : vector<32x16xf32>
    %cst_125 = arith.constant 2.000000e-01 : f32
    %158 = vector.broadcast %cst_125 : f32 to vector<32x16xf32>
    %159 = arith.mulf %158, %155 : vector<32x16xf32>
    %160 = arith.select %157, %155, %159 : vector<32x16xi1>, vector<32x16xf32>
    %161 = arith.truncf %160 : vector<32x16xf32> to vector<32x16xbf16>
    %cst_126 = arith.constant 0.000000e+00 : f32
    %162 = vector.broadcast %cst_126 : f32 to vector<2x16xf32>
    %c0_127 = arith.constant 0 : index
    %c0_128 = arith.constant 0 : index
    %c0_129 = arith.constant 0 : index
    %163 = vector.load %arg5[%c0_127, %c0_128, %c0_129] : memref<16x2x32xbf16, #tpu.memory_space<vmem>>, vector<1x2x32xbf16>
    %164 = vector.shape_cast %163 : vector<1x2x32xbf16> to vector<2x32xbf16>
    %cst_130 = arith.constant dense<0.000000e+00> : vector<2x16xf32>
    %165 = tpu.matmul %164, %161, %cst_130 {dimension_numbers = #tpu.dot_dimension_numbers<[1], [0], [0], [1], [0, 0, 1, 1], [], []>} : vector<2x32xbf16>, vector<32x16xbf16>, vector<2x16xf32> -> vector<2x16xf32>
    %c0_131 = arith.constant 0 : index
    %c0_132 = arith.constant 0 : index
    %c0_133 = arith.constant 0 : index
    %166 = vector.load %arg6[%c0_131, %c0_132, %c0_133] : memref<16x1x16xbf16, #tpu.memory_space<vmem>>, vector<1x1x16xbf16>
    %167 = vector.shape_cast %166 : vector<1x1x16xbf16> to vector<1x16xbf16>
    %168 = arith.extf %167 : vector<1x16xbf16> to vector<1x16xf32>
    %169 = vector.broadcast %168 : vector<1x16xf32> to vector<2x16xf32>
    %170 = arith.mulf %165, %169 : vector<2x16xf32>
    %171 = arith.addf %162, %170 : vector<2x16xf32>
    %c1_134 = arith.constant 1 : index
    %c0_135 = arith.constant 0 : index
    %c0_136 = arith.constant 0 : index
    %172 = vector.load %arg5[%c1_134, %c0_135, %c0_136] : memref<16x2x32xbf16, #tpu.memory_space<vmem>>, vector<1x2x32xbf16>
    %173 = vector.shape_cast %172 : vector<1x2x32xbf16> to vector<2x32xbf16>
    %cst_137 = arith.constant dense<0.000000e+00> : vector<2x16xf32>
    %174 = tpu.matmul %173, %161, %cst_137 {dimension_numbers = #tpu.dot_dimension_numbers<[1], [0], [0], [1], [0, 0, 1, 1], [], []>} : vector<2x32xbf16>, vector<32x16xbf16>, vector<2x16xf32> -> vector<2x16xf32>
    %c1_138 = arith.constant 1 : index
    %c0_139 = arith.constant 0 : index
    %c0_140 = arith.constant 0 : index
    %175 = vector.load %arg6[%c1_138, %c0_139, %c0_140] : memref<16x1x16xbf16, #tpu.memory_space<vmem>>, vector<1x1x16xbf16>
    %176 = vector.shape_cast %175 : vector<1x1x16xbf16> to vector<1x16xbf16>
    %177 = arith.extf %176 : vector<1x16xbf16> to vector<1x16xf32>
    %178 = vector.broadcast %177 : vector<1x16xf32> to vector<2x16xf32>
    %179 = arith.mulf %174, %178 : vector<2x16xf32>
    %180 = arith.addf %171, %179 : vector<2x16xf32>
    %c2_141 = arith.constant 2 : index
    %c0_142 = arith.constant 0 : index
    %c0_143 = arith.constant 0 : index
    %181 = vector.load %arg5[%c2_141, %c0_142, %c0_143] : memref<16x2x32xbf16, #tpu.memory_space<vmem>>, vector<1x2x32xbf16>
    %182 = vector.shape_cast %181 : vector<1x2x32xbf16> to vector<2x32xbf16>
    %cst_144 = arith.constant dense<0.000000e+00> : vector<2x16xf32>
    %183 = tpu.matmul %182, %161, %cst_144 {dimension_numbers = #tpu.dot_dimension_numbers<[1], [0], [0], [1], [0, 0, 1, 1], [], []>} : vector<2x32xbf16>, vector<32x16xbf16>, vector<2x16xf32> -> vector<2x16xf32>
    %c2_145 = arith.constant 2 : index
    %c0_146 = arith.constant 0 : index
    %c0_147 = arith.constant 0 : index
    %184 = vector.load %arg6[%c2_145, %c0_146, %c0_147] : memref<16x1x16xbf16, #tpu.memory_space<vmem>>, vector<1x1x16xbf16>
    %185 = vector.shape_cast %184 : vector<1x1x16xbf16> to vector<1x16xbf16>
    %186 = arith.extf %185 : vector<1x16xbf16> to vector<1x16xf32>
    %187 = vector.broadcast %186 : vector<1x16xf32> to vector<2x16xf32>
    %188 = arith.mulf %183, %187 : vector<2x16xf32>
    %189 = arith.addf %180, %188 : vector<2x16xf32>
    %c3_148 = arith.constant 3 : index
    %c0_149 = arith.constant 0 : index
    %c0_150 = arith.constant 0 : index
    %190 = vector.load %arg5[%c3_148, %c0_149, %c0_150] : memref<16x2x32xbf16, #tpu.memory_space<vmem>>, vector<1x2x32xbf16>
    %191 = vector.shape_cast %190 : vector<1x2x32xbf16> to vector<2x32xbf16>
    %cst_151 = arith.constant dense<0.000000e+00> : vector<2x16xf32>
    %192 = tpu.matmul %191, %161, %cst_151 {dimension_numbers = #tpu.dot_dimension_numbers<[1], [0], [0], [1], [0, 0, 1, 1], [], []>} : vector<2x32xbf16>, vector<32x16xbf16>, vector<2x16xf32> -> vector<2x16xf32>
    %c3_152 = arith.constant 3 : index
    %c0_153 = arith.constant 0 : index
    %c0_154 = arith.constant 0 : index
    %193 = vector.load %arg6[%c3_152, %c0_153, %c0_154] : memref<16x1x16xbf16, #tpu.memory_space<vmem>>, vector<1x1x16xbf16>
    %194 = vector.shape_cast %193 : vector<1x1x16xbf16> to vector<1x16xbf16>
    %195 = arith.extf %194 : vector<1x16xbf16> to vector<1x16xf32>
    %196 = vector.broadcast %195 : vector<1x16xf32> to vector<2x16xf32>
    %197 = arith.mulf %192, %196 : vector<2x16xf32>
    %198 = arith.addf %189, %197 : vector<2x16xf32>
    %c4_155 = arith.constant 4 : index
    %c0_156 = arith.constant 0 : index
    %c0_157 = arith.constant 0 : index
    %199 = vector.load %arg5[%c4_155, %c0_156, %c0_157] : memref<16x2x32xbf16, #tpu.memory_space<vmem>>, vector<1x2x32xbf16>
    %200 = vector.shape_cast %199 : vector<1x2x32xbf16> to vector<2x32xbf16>
    %cst_158 = arith.constant dense<0.000000e+00> : vector<2x16xf32>
    %201 = tpu.matmul %200, %161, %cst_158 {dimension_numbers = #tpu.dot_dimension_numbers<[1], [0], [0], [1], [0, 0, 1, 1], [], []>} : vector<2x32xbf16>, vector<32x16xbf16>, vector<2x16xf32> -> vector<2x16xf32>
    %c4_159 = arith.constant 4 : index
    %c0_160 = arith.constant 0 : index
    %c0_161 = arith.constant 0 : index
    %202 = vector.load %arg6[%c4_159, %c0_160, %c0_161] : memref<16x1x16xbf16, #tpu.memory_space<vmem>>, vector<1x1x16xbf16>
    %203 = vector.shape_cast %202 : vector<1x1x16xbf16> to vector<1x16xbf16>
    %204 = arith.extf %203 : vector<1x16xbf16> to vector<1x16xf32>
    %205 = vector.broadcast %204 : vector<1x16xf32> to vector<2x16xf32>
    %206 = arith.mulf %201, %205 : vector<2x16xf32>
    %207 = arith.addf %198, %206 : vector<2x16xf32>
    %c5_162 = arith.constant 5 : index
    %c0_163 = arith.constant 0 : index
    %c0_164 = arith.constant 0 : index
    %208 = vector.load %arg5[%c5_162, %c0_163, %c0_164] : memref<16x2x32xbf16, #tpu.memory_space<vmem>>, vector<1x2x32xbf16>
    %209 = vector.shape_cast %208 : vector<1x2x32xbf16> to vector<2x32xbf16>
    %cst_165 = arith.constant dense<0.000000e+00> : vector<2x16xf32>
    %210 = tpu.matmul %209, %161, %cst_165 {dimension_numbers = #tpu.dot_dimension_numbers<[1], [0], [0], [1], [0, 0, 1, 1], [], []>} : vector<2x32xbf16>, vector<32x16xbf16>, vector<2x16xf32> -> vector<2x16xf32>
    %c5_166 = arith.constant 5 : index
    %c0_167 = arith.constant 0 : index
    %c0_168 = arith.constant 0 : index
    %211 = vector.load %arg6[%c5_166, %c0_167, %c0_168] : memref<16x1x16xbf16, #tpu.memory_space<vmem>>, vector<1x1x16xbf16>
    %212 = vector.shape_cast %211 : vector<1x1x16xbf16> to vector<1x16xbf16>
    %213 = arith.extf %212 : vector<1x16xbf16> to vector<1x16xf32>
    %214 = vector.broadcast %213 : vector<1x16xf32> to vector<2x16xf32>
    %215 = arith.mulf %210, %214 : vector<2x16xf32>
    %216 = arith.addf %207, %215 : vector<2x16xf32>
    %c6_169 = arith.constant 6 : index
    %c0_170 = arith.constant 0 : index
    %c0_171 = arith.constant 0 : index
    %217 = vector.load %arg5[%c6_169, %c0_170, %c0_171] : memref<16x2x32xbf16, #tpu.memory_space<vmem>>, vector<1x2x32xbf16>
    %218 = vector.shape_cast %217 : vector<1x2x32xbf16> to vector<2x32xbf16>
    %cst_172 = arith.constant dense<0.000000e+00> : vector<2x16xf32>
    %219 = tpu.matmul %218, %161, %cst_172 {dimension_numbers = #tpu.dot_dimension_numbers<[1], [0], [0], [1], [0, 0, 1, 1], [], []>} : vector<2x32xbf16>, vector<32x16xbf16>, vector<2x16xf32> -> vector<2x16xf32>
    %c6_173 = arith.constant 6 : index
    %c0_174 = arith.constant 0 : index
    %c0_175 = arith.constant 0 : index
    %220 = vector.load %arg6[%c6_173, %c0_174, %c0_175] : memref<16x1x16xbf16, #tpu.memory_space<vmem>>, vector<1x1x16xbf16>
    %221 = vector.shape_cast %220 : vector<1x1x16xbf16> to vector<1x16xbf16>
    %222 = arith.extf %221 : vector<1x16xbf16> to vector<1x16xf32>
    %223 = vector.broadcast %222 : vector<1x16xf32> to vector<2x16xf32>
    %224 = arith.mulf %219, %223 : vector<2x16xf32>
    %225 = arith.addf %216, %224 : vector<2x16xf32>
    %c7_176 = arith.constant 7 : index
    %c0_177 = arith.constant 0 : index
    %c0_178 = arith.constant 0 : index
    %226 = vector.load %arg5[%c7_176, %c0_177, %c0_178] : memref<16x2x32xbf16, #tpu.memory_space<vmem>>, vector<1x2x32xbf16>
    %227 = vector.shape_cast %226 : vector<1x2x32xbf16> to vector<2x32xbf16>
    %cst_179 = arith.constant dense<0.000000e+00> : vector<2x16xf32>
    %228 = tpu.matmul %227, %161, %cst_179 {dimension_numbers = #tpu.dot_dimension_numbers<[1], [0], [0], [1], [0, 0, 1, 1], [], []>} : vector<2x32xbf16>, vector<32x16xbf16>, vector<2x16xf32> -> vector<2x16xf32>
    %c7_180 = arith.constant 7 : index
    %c0_181 = arith.constant 0 : index
    %c0_182 = arith.constant 0 : index
    %229 = vector.load %arg6[%c7_180, %c0_181, %c0_182] : memref<16x1x16xbf16, #tpu.memory_space<vmem>>, vector<1x1x16xbf16>
    %230 = vector.shape_cast %229 : vector<1x1x16xbf16> to vector<1x16xbf16>
    %231 = arith.extf %230 : vector<1x16xbf16> to vector<1x16xf32>
    %232 = vector.broadcast %231 : vector<1x16xf32> to vector<2x16xf32>
    %233 = arith.mulf %228, %232 : vector<2x16xf32>
    %234 = arith.addf %225, %233 : vector<2x16xf32>
    %c8_183 = arith.constant 8 : index
    %c0_184 = arith.constant 0 : index
    %c0_185 = arith.constant 0 : index
    %235 = vector.load %arg5[%c8_183, %c0_184, %c0_185] : memref<16x2x32xbf16, #tpu.memory_space<vmem>>, vector<1x2x32xbf16>
    %236 = vector.shape_cast %235 : vector<1x2x32xbf16> to vector<2x32xbf16>
    %cst_186 = arith.constant dense<0.000000e+00> : vector<2x16xf32>
    %237 = tpu.matmul %236, %161, %cst_186 {dimension_numbers = #tpu.dot_dimension_numbers<[1], [0], [0], [1], [0, 0, 1, 1], [], []>} : vector<2x32xbf16>, vector<32x16xbf16>, vector<2x16xf32> -> vector<2x16xf32>
    %c8_187 = arith.constant 8 : index
    %c0_188 = arith.constant 0 : index
    %c0_189 = arith.constant 0 : index
    %238 = vector.load %arg6[%c8_187, %c0_188, %c0_189] : memref<16x1x16xbf16, #tpu.memory_space<vmem>>, vector<1x1x16xbf16>
    %239 = vector.shape_cast %238 : vector<1x1x16xbf16> to vector<1x16xbf16>
    %240 = arith.extf %239 : vector<1x16xbf16> to vector<1x16xf32>
    %241 = vector.broadcast %240 : vector<1x16xf32> to vector<2x16xf32>
    %242 = arith.mulf %237, %241 : vector<2x16xf32>
    %243 = arith.addf %234, %242 : vector<2x16xf32>
    %c9_190 = arith.constant 9 : index
    %c0_191 = arith.constant 0 : index
    %c0_192 = arith.constant 0 : index
    %244 = vector.load %arg5[%c9_190, %c0_191, %c0_192] : memref<16x2x32xbf16, #tpu.memory_space<vmem>>, vector<1x2x32xbf16>
    %245 = vector.shape_cast %244 : vector<1x2x32xbf16> to vector<2x32xbf16>
    %cst_193 = arith.constant dense<0.000000e+00> : vector<2x16xf32>
    %246 = tpu.matmul %245, %161, %cst_193 {dimension_numbers = #tpu.dot_dimension_numbers<[1], [0], [0], [1], [0, 0, 1, 1], [], []>} : vector<2x32xbf16>, vector<32x16xbf16>, vector<2x16xf32> -> vector<2x16xf32>
    %c9_194 = arith.constant 9 : index
    %c0_195 = arith.constant 0 : index
    %c0_196 = arith.constant 0 : index
    %247 = vector.load %arg6[%c9_194, %c0_195, %c0_196] : memref<16x1x16xbf16, #tpu.memory_space<vmem>>, vector<1x1x16xbf16>
    %248 = vector.shape_cast %247 : vector<1x1x16xbf16> to vector<1x16xbf16>
    %249 = arith.extf %248 : vector<1x16xbf16> to vector<1x16xf32>
    %250 = vector.broadcast %249 : vector<1x16xf32> to vector<2x16xf32>
    %251 = arith.mulf %246, %250 : vector<2x16xf32>
    %252 = arith.addf %243, %251 : vector<2x16xf32>
    %c10_197 = arith.constant 10 : index
    %c0_198 = arith.constant 0 : index
    %c0_199 = arith.constant 0 : index
    %253 = vector.load %arg5[%c10_197, %c0_198, %c0_199] : memref<16x2x32xbf16, #tpu.memory_space<vmem>>, vector<1x2x32xbf16>
    %254 = vector.shape_cast %253 : vector<1x2x32xbf16> to vector<2x32xbf16>
    %cst_200 = arith.constant dense<0.000000e+00> : vector<2x16xf32>
    %255 = tpu.matmul %254, %161, %cst_200 {dimension_numbers = #tpu.dot_dimension_numbers<[1], [0], [0], [1], [0, 0, 1, 1], [], []>} : vector<2x32xbf16>, vector<32x16xbf16>, vector<2x16xf32> -> vector<2x16xf32>
    %c10_201 = arith.constant 10 : index
    %c0_202 = arith.constant 0 : index
    %c0_203 = arith.constant 0 : index
    %256 = vector.load %arg6[%c10_201, %c0_202, %c0_203] : memref<16x1x16xbf16, #tpu.memory_space<vmem>>, vector<1x1x16xbf16>
    %257 = vector.shape_cast %256 : vector<1x1x16xbf16> to vector<1x16xbf16>
    %258 = arith.extf %257 : vector<1x16xbf16> to vector<1x16xf32>
    %259 = vector.broadcast %258 : vector<1x16xf32> to vector<2x16xf32>
    %260 = arith.mulf %255, %259 : vector<2x16xf32>
    %261 = arith.addf %252, %260 : vector<2x16xf32>
    %c11_204 = arith.constant 11 : index
    %c0_205 = arith.constant 0 : index
    %c0_206 = arith.constant 0 : index
    %262 = vector.load %arg5[%c11_204, %c0_205, %c0_206] : memref<16x2x32xbf16, #tpu.memory_space<vmem>>, vector<1x2x32xbf16>
    %263 = vector.shape_cast %262 : vector<1x2x32xbf16> to vector<2x32xbf16>
    %cst_207 = arith.constant dense<0.000000e+00> : vector<2x16xf32>
    %264 = tpu.matmul %263, %161, %cst_207 {dimension_numbers = #tpu.dot_dimension_numbers<[1], [0], [0], [1], [0, 0, 1, 1], [], []>} : vector<2x32xbf16>, vector<32x16xbf16>, vector<2x16xf32> -> vector<2x16xf32>
    %c11_208 = arith.constant 11 : index
    %c0_209 = arith.constant 0 : index
    %c0_210 = arith.constant 0 : index
    %265 = vector.load %arg6[%c11_208, %c0_209, %c0_210] : memref<16x1x16xbf16, #tpu.memory_space<vmem>>, vector<1x1x16xbf16>
    %266 = vector.shape_cast %265 : vector<1x1x16xbf16> to vector<1x16xbf16>
    %267 = arith.extf %266 : vector<1x16xbf16> to vector<1x16xf32>
    %268 = vector.broadcast %267 : vector<1x16xf32> to vector<2x16xf32>
    %269 = arith.mulf %264, %268 : vector<2x16xf32>
    %270 = arith.addf %261, %269 : vector<2x16xf32>
    %c12_211 = arith.constant 12 : index
    %c0_212 = arith.constant 0 : index
    %c0_213 = arith.constant 0 : index
    %271 = vector.load %arg5[%c12_211, %c0_212, %c0_213] : memref<16x2x32xbf16, #tpu.memory_space<vmem>>, vector<1x2x32xbf16>
    %272 = vector.shape_cast %271 : vector<1x2x32xbf16> to vector<2x32xbf16>
    %cst_214 = arith.constant dense<0.000000e+00> : vector<2x16xf32>
    %273 = tpu.matmul %272, %161, %cst_214 {dimension_numbers = #tpu.dot_dimension_numbers<[1], [0], [0], [1], [0, 0, 1, 1], [], []>} : vector<2x32xbf16>, vector<32x16xbf16>, vector<2x16xf32> -> vector<2x16xf32>
    %c12_215 = arith.constant 12 : index
    %c0_216 = arith.constant 0 : index
    %c0_217 = arith.constant 0 : index
    %274 = vector.load %arg6[%c12_215, %c0_216, %c0_217] : memref<16x1x16xbf16, #tpu.memory_space<vmem>>, vector<1x1x16xbf16>
    %275 = vector.shape_cast %274 : vector<1x1x16xbf16> to vector<1x16xbf16>
    %276 = arith.extf %275 : vector<1x16xbf16> to vector<1x16xf32>
    %277 = vector.broadcast %276 : vector<1x16xf32> to vector<2x16xf32>
    %278 = arith.mulf %273, %277 : vector<2x16xf32>
    %279 = arith.addf %270, %278 : vector<2x16xf32>
    %c13_218 = arith.constant 13 : index
    %c0_219 = arith.constant 0 : index
    %c0_220 = arith.constant 0 : index
    %280 = vector.load %arg5[%c13_218, %c0_219, %c0_220] : memref<16x2x32xbf16, #tpu.memory_space<vmem>>, vector<1x2x32xbf16>
    %281 = vector.shape_cast %280 : vector<1x2x32xbf16> to vector<2x32xbf16>
    %cst_221 = arith.constant dense<0.000000e+00> : vector<2x16xf32>
    %282 = tpu.matmul %281, %161, %cst_221 {dimension_numbers = #tpu.dot_dimension_numbers<[1], [0], [0], [1], [0, 0, 1, 1], [], []>} : vector<2x32xbf16>, vector<32x16xbf16>, vector<2x16xf32> -> vector<2x16xf32>
    %c13_222 = arith.constant 13 : index
    %c0_223 = arith.constant 0 : index
    %c0_224 = arith.constant 0 : index
    %283 = vector.load %arg6[%c13_222, %c0_223, %c0_224] : memref<16x1x16xbf16, #tpu.memory_space<vmem>>, vector<1x1x16xbf16>
    %284 = vector.shape_cast %283 : vector<1x1x16xbf16> to vector<1x16xbf16>
    %285 = arith.extf %284 : vector<1x16xbf16> to vector<1x16xf32>
    %286 = vector.broadcast %285 : vector<1x16xf32> to vector<2x16xf32>
    %287 = arith.mulf %282, %286 : vector<2x16xf32>
    %288 = arith.addf %279, %287 : vector<2x16xf32>
    %c14_225 = arith.constant 14 : index
    %c0_226 = arith.constant 0 : index
    %c0_227 = arith.constant 0 : index
    %289 = vector.load %arg5[%c14_225, %c0_226, %c0_227] : memref<16x2x32xbf16, #tpu.memory_space<vmem>>, vector<1x2x32xbf16>
    %290 = vector.shape_cast %289 : vector<1x2x32xbf16> to vector<2x32xbf16>
    %cst_228 = arith.constant dense<0.000000e+00> : vector<2x16xf32>
    %291 = tpu.matmul %290, %161, %cst_228 {dimension_numbers = #tpu.dot_dimension_numbers<[1], [0], [0], [1], [0, 0, 1, 1], [], []>} : vector<2x32xbf16>, vector<32x16xbf16>, vector<2x16xf32> -> vector<2x16xf32>
    %c14_229 = arith.constant 14 : index
    %c0_230 = arith.constant 0 : index
    %c0_231 = arith.constant 0 : index
    %292 = vector.load %arg6[%c14_229, %c0_230, %c0_231] : memref<16x1x16xbf16, #tpu.memory_space<vmem>>, vector<1x1x16xbf16>
    %293 = vector.shape_cast %292 : vector<1x1x16xbf16> to vector<1x16xbf16>
    %294 = arith.extf %293 : vector<1x16xbf16> to vector<1x16xf32>
    %295 = vector.broadcast %294 : vector<1x16xf32> to vector<2x16xf32>
    %296 = arith.mulf %291, %295 : vector<2x16xf32>
    %297 = arith.addf %288, %296 : vector<2x16xf32>
    %c15_232 = arith.constant 15 : index
    %c0_233 = arith.constant 0 : index
    %c0_234 = arith.constant 0 : index
    %298 = vector.load %arg5[%c15_232, %c0_233, %c0_234] : memref<16x2x32xbf16, #tpu.memory_space<vmem>>, vector<1x2x32xbf16>
    %299 = vector.shape_cast %298 : vector<1x2x32xbf16> to vector<2x32xbf16>
    %cst_235 = arith.constant dense<0.000000e+00> : vector<2x16xf32>
    %300 = tpu.matmul %299, %161, %cst_235 {dimension_numbers = #tpu.dot_dimension_numbers<[1], [0], [0], [1], [0, 0, 1, 1], [], []>} : vector<2x32xbf16>, vector<32x16xbf16>, vector<2x16xf32> -> vector<2x16xf32>
    %c15_236 = arith.constant 15 : index
    %c0_237 = arith.constant 0 : index
    %c0_238 = arith.constant 0 : index
    %301 = vector.load %arg6[%c15_236, %c0_237, %c0_238] : memref<16x1x16xbf16, #tpu.memory_space<vmem>>, vector<1x1x16xbf16>
    %302 = vector.shape_cast %301 : vector<1x1x16xbf16> to vector<1x16xbf16>
    %303 = arith.extf %302 : vector<1x16xbf16> to vector<1x16xf32>
    %304 = vector.broadcast %303 : vector<1x16xf32> to vector<2x16xf32>
    %305 = arith.mulf %300, %304 : vector<2x16xf32>
    %306 = arith.addf %297, %305 : vector<2x16xf32>
    %cst_239 = arith.constant dense<0.000000e+00> : vector<2xf32>
    %307 = vector.multi_reduction <add>, %306, %cst_239 [1] : vector<2x16xf32> to vector<2xf32>
    %308 = vector.shape_cast %307 : vector<2xf32> to vector<2x1xf32>
    %309 = arith.negf %308 : vector<2x1xf32>
    %310 = math.exp %309 : vector<2x1xf32>
    %cst_240 = arith.constant 1.000000e+00 : f32
    %311 = vector.broadcast %cst_240 : f32 to vector<2x1xf32>
    %312 = arith.addf %311, %310 : vector<2x1xf32>
    %313 = arith.divf %311, %312 : vector<2x1xf32>
    %c0_241 = arith.constant 0 : index
    %c0_242 = arith.constant 0 : index
    %314 = vector.load %arg7[%c0_241, %c0_242] : memref<2x1xf32, #tpu.memory_space<vmem>>, vector<2x1xf32>
    tpu.vector_store %arg7[%c0_241, %c0_242], %313 {strides = array<i32>} : memref<2x1xf32, #tpu.memory_space<vmem>>, vector<2x1xf32>,
    return
  }
  func.func @transform_0(%arg0: i32) -> (i32, i32) {
    %c0_i32 = arith.constant 0 : i32
    %c0_i32_0 = arith.constant 0 : i32
    %c0_i32_1 = arith.constant 0 : i32
    return %c0_i32, %c0_i32_0 : i32, i32
  }
  func.func @transform_1(%arg0: i32) -> (i32, i32) {
    %c0_i32 = arith.constant 0 : i32
    %c0_i32_0 = arith.constant 0 : i32
    %c0_i32_1 = arith.constant 0 : i32
    return %c0_i32, %c0_i32_0 : i32, i32
  }
  func.func @transform_2(%arg0: i32) -> (i32, i32, i32) {
    %c0_i32 = arith.constant 0 : i32
    %c0_i32_0 = arith.constant 0 : i32
    %c0_i32_1 = arith.constant 0 : i32
    %c0_i32_2 = arith.constant 0 : i32
    return %c0_i32, %c0_i32_0, %c0_i32_1 : i32, i32, i32
  }
  func.func @transform_3(%arg0: i32) -> (i32, i32, i32) {
    %c0_i32 = arith.constant 0 : i32
    %c0_i32_0 = arith.constant 0 : i32
    %c0_i32_1 = arith.constant 0 : i32
    %c0_i32_2 = arith.constant 0 : i32
    return %c0_i32, %c0_i32_0, %c0_i32_1 : i32, i32, i32
  }
  func.func @transform_4(%arg0: i32) -> (i32, i32, i32) {
    %c0_i32 = arith.constant 0 : i32
    %c0_i32_0 = arith.constant 0 : i32
    %c0_i32_1 = arith.constant 0 : i32
    %c0_i32_2 = arith.constant 0 : i32
    return %c0_i32, %c0_i32_0, %c0_i32_1 : i32, i32, i32
  }
  func.func @transform_5(%arg0: i32) -> (i32, i32, i32) {
    %c0_i32 = arith.constant 0 : i32
    %c0_i32_0 = arith.constant 0 : i32
    %c0_i32_1 = arith.constant 0 : i32
    %c0_i32_2 = arith.constant 0 : i32
    return %c0_i32, %c0_i32_0, %c0_i32_1 : i32, i32, i32
  }
  func.func @transform_6(%arg0: i32) -> (i32, i32) {
    %c0_i32 = arith.constant 0 : i32
    %c0_i32_0 = arith.constant 0 : i32
    %c0_i32_1 = arith.constant 0 : i32
    return %c0_i32, %c0_i32_0 : i32, i32
  }
}

</mosaic_0001>

<llo_original>
// kernel: forward.1
$region0: #{forward.1}
  #allocation0 [shape = 'u32[]', space=smem, size = 0x4, offset = 0x4, fixed_abs, tag = 'smem constant byte address 0x4 - core index']
  #allocation1 [shape = 'u32[72,128]{1,0:T(1,128)}', space=vmem, size = 0x9000, scoped, tag = 'internal scratch']
  %s0 = inlined_call_operand.vmem [shape: bf16[128,48], index: 0, kind: input, shape index: {}]
  %s1 = inlined_call_operand.vmem [shape: bf16[48,8], index: 1, kind: input, shape index: {}]
  %s2 = inlined_call_operand.vmem [shape: bf16[16,32,128], index: 2, kind: input, shape index: {}]
  %s3 = inlined_call_operand.vmem [shape: bf16[16,8,16], index: 3, kind: input, shape index: {}]
  %s4 = inlined_call_operand.vmem [shape: bf16[16,2,32], index: 4, kind: input, shape index: {}]
  %s5 = inlined_call_operand.vmem [shape: bf16[16,1,16], index: 5, kind: input, shape index: {}]
  %s6 = inlined_call_operand.vmem [shape: f32[2,1], index: 6, kind: output, shape index: {}]
  %s7 = sld [smem:[#allocation0]]
  $region34: #{forward.1} parent=0
    _
  %s9 = ssub.s32 1, %s7
  %s10 = scalar_select 0, %s9, %s7
  // Predicated region
  $region2: #{forward.1} parent=0 // pred_check
    _
  $region3: #{forward.1} parent=0 // pred_check_branch
    %12 = sbr.rel (0) target = $region5
  $region4: #{forward.1} parent=0 // pred_region
    _
  $region5: #{forward.1} parent=0 // pred_fallthru
    _
  // Predicated region
  $region6: #{forward.1} parent=0 // pred_check
    _
  $region7: #{forward.1} parent=0 // pred_check_branch
    %14 = sbr.rel (0) target = $region9
  $region8: #{forward.1} parent=0 // pred_region
    _
  $region9: #{forward.1} parent=0 // pred_fallthru
    _
  // Predicated region
  $region10: #{forward.1} parent=0 // pred_check
    _
  $region11: #{forward.1} parent=0 // pred_check_branch
    %16 = sbr.rel (0) target = $region13
  $region12: #{forward.1} parent=0 // pred_region
    _
  $region13: #{forward.1} parent=0 // pred_fallthru
    _
  // Predicated region
  $region14: #{forward.1} parent=0 // pred_check
    _
  $region15: #{forward.1} parent=0 // pred_check_branch
    %18 = sbr.rel (0) target = $region17
  $region16: #{forward.1} parent=0 // pred_region
    _
  $region17: #{forward.1} parent=0 // pred_fallthru
    _
  // Predicated region
  $region18: #{forward.1} parent=0 // pred_check
    _
  $region19: #{forward.1} parent=0 // pred_check_branch
    %20 = sbr.rel (0) target = $region21
  $region20: #{forward.1} parent=0 // pred_region
    _
  $region21: #{forward.1} parent=0 // pred_fallthru
    _
  // Predicated region
  $region22: #{forward.1} parent=0 // pred_check
    _
  $region23: #{forward.1} parent=0 // pred_check_branch
    %22 = sbr.rel (0) target = $region25
  $region24: #{forward.1} parent=0 // pred_region
    _
  $region25: #{forward.1} parent=0 // pred_fallthru
    _
  %v24 = vld [vmem:[%s0] sm:$0xf]
  %v25 = vld [vmem:[%s0 + $0x4] sm:$0xf]
  %v26 = vld [vmem:[%s0 + $0x8] sm:$0xf]
  %v27 = vld [vmem:[%s0 + $0xc] sm:$0xf]
  %v28 = vld [vmem:[%s0 + $0x10] sm:$0xf]
  %v29 = vld [vmem:[%s0 + $0x14] sm:$0xf]
  %v30 = vld [vmem:[%s0 + $0x18] sm:$0xf]
  %v31 = vld [vmem:[%s0 + $0x1c] sm:$0xf]
  %v32 = vld [vmem:[%s0 + $0x20] sm:$0xf]
  %v33 = vld [vmem:[%s0 + $0x24] sm:$0xf]
  %v34 = vld [vmem:[%s0 + $0x28] sm:$0xf]
  %v35 = vld [vmem:[%s0 + $0x2c] sm:$0xf]
  %v36 = vld [vmem:[%s0 + $0x30] sm:$0xf]
  %v37 = vld [vmem:[%s0 + $0x34] sm:$0xf]
  %v38 = vld [vmem:[%s0 + $0x38] sm:$0xf]
  %v39 = vld [vmem:[%s0 + $0x3c] sm:$0xf]
  %v40 = vld [vmem:[%s1] sm:$0xf]
  %v41 = vld [vmem:[%s1 + $0x4] sm:$0xf]
  %v42 = vld [vmem:[%s1 + $0x8] sm:$0xf]
  %v43 = vld [vmem:[%s1 + $0xc] sm:$0xf]
  %v44 = vld [vmem:[%s1 + $0x10] sm:$0xf]
  %v45 = vld [vmem:[%s1 + $0x14] sm:$0xf]
  %v62 = vunpack.c.l.b16 %v24
  %v63 = vunpack.c.l.b16 %v25
  %v64 = vunpack.c.l.b16 %v26
  %v65 = vunpack.c.l.b16 %v27
  %v66 = vunpack.c.l.b16 %v28
  %v67 = vunpack.c.l.b16 %v29
  %v68 = vunpack.c.l.b16 %v30
  %v69 = vunpack.c.l.b16 %v31
  %v70 = vunpack.c.l.b16 %v32
  %v71 = vunpack.c.l.b16 %v33
  %v72 = vunpack.c.l.b16 %v34
  %v73 = vunpack.c.l.b16 %v35
  %v74 = vunpack.c.l.b16 %v36
  %v75 = vunpack.c.l.b16 %v37
  %v76 = vunpack.c.l.b16 %v38
  %v77 = vunpack.c.l.b16 %v39
  %v78 = vpack.c.b16 %v63, %v62
  %v79 = vpack.c.b16 %v65, %v64
  %v80 = vpack.c.b16 %v67, %v66
  %v81 = vpack.c.b16 %v69, %v68
  %v82 = vpack.c.b16 %v71, %v70
  %v83 = vpack.c.b16 %v73, %v72
  %v84 = vpack.c.b16 %v75, %v74
  %v85 = vpack.c.b16 %v77, %v76
  %v92 = vunpack.c.l.b16 %v40
  %v93 = vunpack.c.l.b16 %v41
  %v94 = vunpack.c.l.b16 %v42
  %v95 = vunpack.c.l.b16 %v43
  %v96 = vunpack.c.l.b16 %v44
  %v97 = vunpack.c.l.b16 %v45
  %v98 = vpack.c.b16 %v93, %v92
  %v99 = vpack.c.b16 %v95, %v94
  %v100 = vpack.c.b16 %v97, %v96
  %vm104 = vcmask 392192
  %v106 = vsel %vm104, %v78, 0
  %v109 = vsel %vm104, %v79, 0
  %v112 = vsel %vm104, %v80, 0
  %v115 = vsel %vm104, %v81, 0
  %v118 = vsel %vm104, %v82, 0
  %v121 = vsel %vm104, %v83, 0
  %v124 = vsel %vm104, %v84, 0
  %v127 = vsel %vm104, %v85, 0
  %129 = vmatpush.bf16.msra.mxu0 0
  %130 = vmatpush.bf16.msra.mxu0 0
  %131 = vmatpush.bf16.msra.mxu0 0
  %132 = vmatpush.bf16.msra.mxu0 0
  %133 = vmatpush.bf16.msra.mxu0 0
  %134 = vmatpush.bf16.msra.mxu0 %v100
  %135 = vmatpush.bf16.msra.mxu0 %v99
  %136 = vmatpush.bf16.msra.mxu0 %v98
  %137 = vmatmul.bf16.gmra.mxu0 %v106
  %v138 = vpop.f32.mrf.mxu0
  %v139 = vadd.f32 0.0, %v138
  %v140 = vpop.f32.mrf.mxu0
  %v141 = vadd.f32 0.0, %v140
  %142 = vmatmul.bf16.gmra.mxu0 %v109
  %v143 = vpop.f32.mrf.mxu0
  %v144 = vadd.f32 0.0, %v143
  %v145 = vpop.f32.mrf.mxu0
  %v146 = vadd.f32 0.0, %v145
  %147 = vmatmul.bf16.gmra.mxu0 %v112
  %v148 = vpop.f32.mrf.mxu0
  %v149 = vadd.f32 0.0, %v148
  %v150 = vpop.f32.mrf.mxu0
  %v151 = vadd.f32 0.0, %v150
  %152 = vmatmul.bf16.gmra.mxu0 %v115
  %v153 = vpop.f32.mrf.mxu0
  %v154 = vadd.f32 0.0, %v153
  %v155 = vpop.f32.mrf.mxu0
  %v156 = vadd.f32 0.0, %v155
  %157 = vmatmul.bf16.gmra.mxu0 %v118
  %v158 = vpop.f32.mrf.mxu0
  %v159 = vadd.f32 0.0, %v158
  %v160 = vpop.f32.mrf.mxu0
  %v161 = vadd.f32 0.0, %v160
  %162 = vmatmul.bf16.gmra.mxu0 %v121
  %v163 = vpop.f32.mrf.mxu0
  %v164 = vadd.f32 0.0, %v163
  %v165 = vpop.f32.mrf.mxu0
  %v166 = vadd.f32 0.0, %v165
  %167 = vmatmul.bf16.gmra.mxu0 %v124
  %v168 = vpop.f32.mrf.mxu0
  %v169 = vadd.f32 0.0, %v168
  %v170 = vpop.f32.mrf.mxu0
  %v171 = vadd.f32 0.0, %v170
  %172 = vmatmul.bf16.gmra.mxu0 %v127
  %v173 = vpop.f32.mrf.mxu0
  %v174 = vadd.f32 0.0, %v173
  %v175 = vpop.f32.mrf.mxu0
  %v176 = vadd.f32 0.0, %v175
  %177 = vdwg.mxu0
  %vm178 = vcmp.ge.f32.partialorder %v139, 0.0
  %vm179 = vcmp.ge.f32.partialorder %v141, 0.0
  %vm180 = vcmp.ge.f32.partialorder %v144, 0.0
  %vm181 = vcmp.ge.f32.partialorder %v146, 0.0
  %vm182 = vcmp.ge.f32.partialorder %v149, 0.0
  %vm183 = vcmp.ge.f32.partialorder %v151, 0.0
  %vm184 = vcmp.ge.f32.partialorder %v154, 0.0
  %vm185 = vcmp.ge.f32.partialorder %v156, 0.0
  %vm186 = vcmp.ge.f32.partialorder %v159, 0.0
  %vm187 = vcmp.ge.f32.partialorder %v161, 0.0
  %vm188 = vcmp.ge.f32.partialorder %v164, 0.0
  %vm189 = vcmp.ge.f32.partialorder %v166, 0.0
  %vm190 = vcmp.ge.f32.partialorder %v169, 0.0
  %vm191 = vcmp.ge.f32.partialorder %v171, 0.0
  %vm192 = vcmp.ge.f32.partialorder %v174, 0.0
  %vm193 = vcmp.ge.f32.partialorder %v176, 0.0
  %v194 = vmul.f32 %v139, 0.2
  %v195 = vmul.f32 %v141, 0.2
  %v196 = vmul.f32 %v144, 0.2
  %v197 = vmul.f32 %v146, 0.2
  %v198 = vmul.f32 %v149, 0.2
  %v199 = vmul.f32 %v151, 0.2
  %v200 = vmul.f32 %v154, 0.2
  %v201 = vmul.f32 %v156, 0.2
  %v202 = vmul.f32 %v159, 0.2
  %v203 = vmul.f32 %v161, 0.2
  %v204 = vmul.f32 %v164, 0.2
  %v205 = vmul.f32 %v166, 0.2
  %v206 = vmul.f32 %v169, 0.2
  %v207 = vmul.f32 %v171, 0.2
  %v208 = vmul.f32 %v174, 0.2
  %v209 = vmul.f32 %v176, 0.2
  %v210 = vsel %vm178, %v139, %v194
  %v211 = vsel %vm179, %v141, %v195
  %v212 = vsel %vm180, %v144, %v196
  %v213 = vsel %vm181, %v146, %v197
  %v214 = vsel %vm182, %v149, %v198
  %v215 = vsel %vm183, %v151, %v199
  %v216 = vsel %vm184, %v154, %v200
  %v217 = vsel %vm185, %v156, %v201
  %v218 = vsel %vm186, %v159, %v202
  %v219 = vsel %vm187, %v161, %v203
  %v220 = vsel %vm188, %v164, %v204
  %v221 = vsel %vm189, %v166, %v205
  %v222 = vsel %vm190, %v169, %v206
  %v223 = vsel %vm191, %v171, %v207
  %v224 = vsel %vm192, %v174, %v208
  %v225 = vsel %vm193, %v176, %v209
  %v226 = vpack.c.bf16 %v211, %v210
  %v227 = vpack.c.bf16 %v213, %v212
  %v228 = vpack.c.bf16 %v215, %v214
  %v229 = vpack.c.bf16 %v217, %v216
  %v230 = vpack.c.bf16 %v219, %v218
  %v231 = vpack.c.bf16 %v221, %v220
  %v232 = vpack.c.bf16 %v223, %v222
  %v233 = vpack.c.bf16 %v225, %v224
  %v234 = vld [vmem:[%s2] sm:$0xf]
  %v235 = vld [vmem:[%s2 + $0x4] sm:$0xf]
  %v236 = vld [vmem:[%s2 + $0x8] sm:$0xf]
  %v237 = vld [vmem:[%s2 + $0xc] sm:$0xf]
  %v242 = vunpack.c.l.b16 %v234
  %v243 = vunpack.c.l.b16 %v235
  %v244 = vunpack.c.l.b16 %v236
  %v245 = vunpack.c.l.b16 %v237
  %v246 = vpack.c.b16 %v243, %v242
  %v247 = vpack.c.b16 %v245, %v244
  %250 = vmatpush.bf16.msra.mxu0 %v233
  %251 = vmatpush.bf16.msra.mxu0 %v232
  %252 = vmatpush.bf16.msra.mxu0 %v231
  %253 = vmatpush.bf16.msra.mxu0 %v230
  %254 = vmatpush.bf16.msra.mxu0 %v229
  %255 = vmatpush.bf16.msra.mxu0 %v228
  %256 = vmatpush.bf16.msra.mxu0 %v227
  %257 = vmatpush.bf16.msra.mxu0 %v226
  %258 = vmatmul.bf16.gmra.mxu0 %v246
  %v259 = vpop.f32.mrf.mxu0
  %v260 = vadd.f32 0.0, %v259
  %v261 = vpop.f32.mrf.mxu0
  %v262 = vadd.f32 0.0, %v261
  %263 = vmatmul.bf16.gmra.mxu0 %v247
  %v264 = vpop.f32.mrf.mxu0
  %v265 = vadd.f32 0.0, %v264
  %v266 = vpop.f32.mrf.mxu0
  %v267 = vadd.f32 0.0, %v266
  %268 = vdwg.mxu0
  %v269 = vpack.c.bf16 %v262, %v260
  %v270 = vpack.c.bf16 %v267, %v265
  %v271 = vld [vmem:[%s3] sm:$0xf]
  %s272 = scalar_lea.vmem %s2, 16
  %v273 = vld [vmem:[%s272] sm:$0xf]
  %v274 = vld [vmem:[%s272 + $0x4] sm:$0xf]
  %v275 = vld [vmem:[%s272 + $0x8] sm:$0xf]
  %v276 = vld [vmem:[%s272 + $0xc] sm:$0xf]
  %v281 = vunpack.c.l.b16 %v273
  %v282 = vunpack.c.l.b16 %v274
  %v283 = vunpack.c.l.b16 %v275
  %v284 = vunpack.c.l.b16 %v276
  %v285 = vpack.c.b16 %v282, %v281
  %v286 = vpack.c.b16 %v284, %v283
  %289 = vmatpush.bf16.msra.mxu0 %v233
  %290 = vmatpush.bf16.msra.mxu0 %v232
  %291 = vmatpush.bf16.msra.mxu0 %v231
  %292 = vmatpush.bf16.msra.mxu0 %v230
  %293 = vmatpush.bf16.msra.mxu0 %v229
  %294 = vmatpush.bf16.msra.mxu0 %v228
  %295 = vmatpush.bf16.msra.mxu0 %v227
  %296 = vmatpush.bf16.msra.mxu0 %v226
  %297 = vmatmul.bf16.gmra.mxu0 %v285
  %v298 = vpop.f32.mrf.mxu0
  %v299 = vadd.f32 0.0, %v298
  %v300 = vpop.f32.mrf.mxu0
  %v301 = vadd.f32 0.0, %v300
  %302 = vmatmul.bf16.gmra.mxu0 %v286
  %v303 = vpop.f32.mrf.mxu0
  %v304 = vadd.f32 0.0, %v303
  %v305 = vpop.f32.mrf.mxu0
  %v306 = vadd.f32 0.0, %v305
  %307 = vdwg.mxu0
  %v308 = vpack.c.bf16 %v301, %v299
  %v309 = vpack.c.bf16 %v306, %v304
  %s310 = scalar_lea.vmem %s3, 4
  %v311 = vld [vmem:[%s310] sm:$0xf]
  %vm312 = vcmask 64512
  %v314 = vsel %vm312, %v308, 0
  %v317 = vsel %vm312, %v309, 0
  %vm319 = vcmask 1043456
  %v321 = vsel %vm319, %v311, 0
  %323 = vmatpush.bf16.msra.mxu0 0
  %324 = vmatpush.bf16.msra.mxu0 0
  %325 = vmatpush.bf16.msra.mxu0 0
  %326 = vmatpush.bf16.msra.mxu0 0
  %327 = vmatpush.bf16.msra.mxu0 0
  %328 = vmatpush.bf16.msra.mxu0 0
  %329 = vmatpush.bf16.msra.mxu0 0
  %330 = vmatpush.bf16.msra.mxu0 %v321
  %331 = vmatmul.bf16.gmra.mxu0 %v314
  %v332 = vpop.f32.mrf.mxu0
  %v333 = vadd.f32 0.0, %v332
  %v334 = vpop.f32.mrf.mxu0
  %v335 = vadd.f32 0.0, %v334
  %336 = vmatmul.bf16.gmra.mxu0 %v317
  %v337 = vpop.f32.mrf.mxu0
  %v338 = vadd.f32 0.0, %v337
  %v339 = vpop.f32.mrf.mxu0
  %v340 = vadd.f32 0.0, %v339
  %341 = vdwg.mxu0
  %v343 = vsel %vm312, %v269, 0
  %v346 = vsel %vm312, %v270, 0
  %v349 = vsel %vm319, %v271, 0
  %351 = vmatpush.bf16.msra.mxu0 0
  %352 = vmatpush.bf16.msra.mxu0 0
  %353 = vmatpush.bf16.msra.mxu0 0
  %354 = vmatpush.bf16.msra.mxu0 0
  %355 = vmatpush.bf16.msra.mxu0 0
  %356 = vmatpush.bf16.msra.mxu0 0
  %357 = vmatpush.bf16.msra.mxu0 0
  %358 = vmatpush.bf16.msra.mxu0 %v349
  %359 = vmatmul.bf16.gmra.mxu0 %v343
  %v360 = vpop.f32.mrf.mxu0
  %v361 = vadd.f32 %v333, %v360
  %v362 = vpop.f32.mrf.mxu0
  %v363 = vadd.f32 %v335, %v362
  %364 = vmatmul.bf16.gmra.mxu0 %v346
  %v365 = vpop.f32.mrf.mxu0
  %v366 = vadd.f32 %v338, %v365
  %v367 = vpop.f32.mrf.mxu0
  %v368 = vadd.f32 %v340, %v367
  %369 = vdwg.mxu0
  %s370 = scalar_lea.vmem %s2, 32
  %v371 = vld [vmem:[%s370] sm:$0xf]
  %v372 = vld [vmem:[%s370 + $0x4] sm:$0xf]
  %v373 = vld [vmem:[%s370 + $0x8] sm:$0xf]
  %v374 = vld [vmem:[%s370 + $0xc] sm:$0xf]
  %v379 = vunpack.c.l.b16 %v371
  %v380 = vunpack.c.l.b16 %v372
  %v381 = vunpack.c.l.b16 %v373
  %v382 = vunpack.c.l.b16 %v374
  %v383 = vpack.c.b16 %v380, %v379
  %v384 = vpack.c.b16 %v382, %v381
  %387 = vmatpush.bf16.msra.mxu0 %v233
  %388 = vmatpush.bf16.msra.mxu0 %v232
  %389 = vmatpush.bf16.msra.mxu0 %v231
  %390 = vmatpush.bf16.msra.mxu0 %v230
  %391 = vmatpush.bf16.msra.mxu0 %v229
  %392 = vmatpush.bf16.msra.mxu0 %v228
  %393 = vmatpush.bf16.msra.mxu0 %v227
  %394 = vmatpush.bf16.msra.mxu0 %v226
  %395 = vmatmul.bf16.gmra.mxu0 %v383
  %v396 = vpop.f32.mrf.mxu0
  %v397 = vadd.f32 0.0, %v396
  %v398 = vpop.f32.mrf.mxu0
  %v399 = vadd.f32 0.0, %v398
  %400 = vmatmul.bf16.gmra.mxu0 %v384
  %v401 = vpop.f32.mrf.mxu0
  %v402 = vadd.f32 0.0, %v401
  %v403 = vpop.f32.mrf.mxu0
  %v404 = vadd.f32 0.0, %v403
  %405 = vdwg.mxu0
  %v406 = vpack.c.bf16 %v399, %v397
  %v407 = vpack.c.bf16 %v404, %v402
  %s408 = scalar_lea.vmem %s3, 8
  %v409 = vld [vmem:[%s408] sm:$0xf]
  %v411 = vsel %vm312, %v406, 0
  %v414 = vsel %vm312, %v407, 0
  %v417 = vsel %vm319, %v409, 0
  %419 = vmatpush.bf16.msra.mxu0 0
  %420 = vmatpush.bf16.msra.mxu0 0
  %421 = vmatpush.bf16.msra.mxu0 0
  %422 = vmatpush.bf16.msra.mxu0 0
  %423 = vmatpush.bf16.msra.mxu0 0
  %424 = vmatpush.bf16.msra.mxu0 0
  %425 = vmatpush.bf16.msra.mxu0 0
  %426 = vmatpush.bf16.msra.mxu0 %v417
  %427 = vmatmul.bf16.gmra.mxu0 %v411
  %v428 = vpop.f32.mrf.mxu0
  %v429 = vadd.f32 0.0, %v428
  %v430 = vpop.f32.mrf.mxu0
  %v431 = vadd.f32 0.0, %v430
  %432 = vmatmul.bf16.gmra.mxu0 %v414
  %v433 = vpop.f32.mrf.mxu0
  %v434 = vadd.f32 0.0, %v433
  %v435 = vpop.f32.mrf.mxu0
  %v436 = vadd.f32 0.0, %v435
  %437 = vdwg.mxu0
  %v438 = vadd.f32 %v361, %v429
  %v439 = vadd.f32 %v363, %v431
  %v440 = vadd.f32 %v366, %v434
  %v441 = vadd.f32 %v368, %v436
  %s442 = scalar_lea.vmem %s2, 48
  %v443 = vld [vmem:[%s442] sm:$0xf]
  %v444 = vld [vmem:[%s442 + $0x4] sm:$0xf]
  %v445 = vld [vmem:[%s442 + $0x8] sm:$0xf]
  %v446 = vld [vmem:[%s442 + $0xc] sm:$0xf]
  %v451 = vunpack.c.l.b16 %v443
  %v452 = vunpack.c.l.b16 %v444
  %v453 = vunpack.c.l.b16 %v445
  %v454 = vunpack.c.l.b16 %v446
  %v455 = vpack.c.b16 %v452, %v451
  %v456 = vpack.c.b16 %v454, %v453
  %459 = vmatpush.bf16.msra.mxu0 %v233
  %460 = vmatpush.bf16.msra.mxu0 %v232
  %461 = vmatpush.bf16.msra.mxu0 %v231
  %462 = vmatpush.bf16.msra.mxu0 %v230
  %463 = vmatpush.bf16.msra.mxu0 %v229
  %464 = vmatpush.bf16.msra.mxu0 %v228
  %465 = vmatpush.bf16.msra.mxu0 %v227
  %466 = vmatpush.bf16.msra.mxu0 %v226
  %467 = vmatmul.bf16.gmra.mxu0 %v455
  %v468 = vpop.f32.mrf.mxu0
  %v469 = vadd.f32 0.0, %v468
  %v470 = vpop.f32.mrf.mxu0
  %v471 = vadd.f32 0.0, %v470
  %472 = vmatmul.bf16.gmra.mxu0 %v456
  %v473 = vpop.f32.mrf.mxu0
  %v474 = vadd.f32 0.0, %v473
  %v475 = vpop.f32.mrf.mxu0
  %v476 = vadd.f32 0.0, %v475
  %477 = vdwg.mxu0
  %v478 = vpack.c.bf16 %v471, %v469
  %v479 = vpack.c.bf16 %v476, %v474
  %s480 = scalar_lea.vmem %s3, 12
  %v481 = vld [vmem:[%s480] sm:$0xf]
  %v483 = vsel %vm312, %v478, 0
  %v486 = vsel %vm312, %v479, 0
  %v489 = vsel %vm319, %v481, 0
  %491 = vmatpush.bf16.msra.mxu0 0
  %492 = vmatpush.bf16.msra.mxu0 0
  %493 = vmatpush.bf16.msra.mxu0 0
  %494 = vmatpush.bf16.msra.mxu0 0
  %495 = vmatpush.bf16.msra.mxu0 0
  %496 = vmatpush.bf16.msra.mxu0 0
  %497 = vmatpush.bf16.msra.mxu0 0
  %498 = vmatpush.bf16.msra.mxu0 %v489
  %499 = vmatmul.bf16.gmra.mxu0 %v483
  %v500 = vpop.f32.mrf.mxu0
  %v501 = vadd.f32 0.0, %v500
  %v502 = vpop.f32.mrf.mxu0
  %v503 = vadd.f32 0.0, %v502
  %504 = vmatmul.bf16.gmra.mxu0 %v486
  %v505 = vpop.f32.mrf.mxu0
  %v506 = vadd.f32 0.0, %v505
  %v507 = vpop.f32.mrf.mxu0
  %v508 = vadd.f32 0.0, %v507
  %509 = vdwg.mxu0
  %v510 = vadd.f32 %v438, %v501
  %v511 = vadd.f32 %v439, %v503
  %v512 = vadd.f32 %v440, %v506
  %v513 = vadd.f32 %v441, %v508
  %s514 = scalar_lea.vmem %s2, 64
  %v515 = vld [vmem:[%s514] sm:$0xf]
  %v516 = vld [vmem:[%s514 + $0x4] sm:$0xf]
  %v517 = vld [vmem:[%s514 + $0x8] sm:$0xf]
  %v518 = vld [vmem:[%s514 + $0xc] sm:$0xf]
  %v523 = vunpack.c.l.b16 %v515
  %v524 = vunpack.c.l.b16 %v516
  %v525 = vunpack.c.l.b16 %v517
  %v526 = vunpack.c.l.b16 %v518
  %v527 = vpack.c.b16 %v524, %v523
  %v528 = vpack.c.b16 %v526, %v525
  %531 = vmatpush.bf16.msra.mxu0 %v233
  %532 = vmatpush.bf16.msra.mxu0 %v232
  %533 = vmatpush.bf16.msra.mxu0 %v231
  %534 = vmatpush.bf16.msra.mxu0 %v230
  %535 = vmatpush.bf16.msra.mxu0 %v229
  %536 = vmatpush.bf16.msra.mxu0 %v228
  %537 = vmatpush.bf16.msra.mxu0 %v227
  %538 = vmatpush.bf16.msra.mxu0 %v226
  %539 = vmatmul.bf16.gmra.mxu0 %v527
  %v540 = vpop.f32.mrf.mxu0
  %v541 = vadd.f32 0.0, %v540
  %v542 = vpop.f32.mrf.mxu0
  %v543 = vadd.f32 0.0, %v542
  %544 = vmatmul.bf16.gmra.mxu0 %v528
  %v545 = vpop.f32.mrf.mxu0
  %v546 = vadd.f32 0.0, %v545
  %v547 = vpop.f32.mrf.mxu0
  %v548 = vadd.f32 0.0, %v547
  %549 = vdwg.mxu0
  %v550 = vpack.c.bf16 %v543, %v541
  %v551 = vpack.c.bf16 %v548, %v546
  %s552 = scalar_lea.vmem %s3, 16
  %v553 = vld [vmem:[%s552] sm:$0xf]
  %v555 = vsel %vm312, %v550, 0
  %v558 = vsel %vm312, %v551, 0
  %v561 = vsel %vm319, %v553, 0
  %563 = vmatpush.bf16.msra.mxu0 0
  %564 = vmatpush.bf16.msra.mxu0 0
  %565 = vmatpush.bf16.msra.mxu0 0
  %566 = vmatpush.bf16.msra.mxu0 0
  %567 = vmatpush.bf16.msra.mxu0 0
  %568 = vmatpush.bf16.msra.mxu0 0
  %569 = vmatpush.bf16.msra.mxu0 0
  %570 = vmatpush.bf16.msra.mxu0 %v561
  %571 = vmatmul.bf16.gmra.mxu0 %v555
  %v572 = vpop.f32.mrf.mxu0
  %v573 = vadd.f32 0.0, %v572
  %v574 = vpop.f32.mrf.mxu0
  %v575 = vadd.f32 0.0, %v574
  %576 = vmatmul.bf16.gmra.mxu0 %v558
  %v577 = vpop.f32.mrf.mxu0
  %v578 = vadd.f32 0.0, %v577
  %v579 = vpop.f32.mrf.mxu0
  %v580 = vadd.f32 0.0, %v579
  %581 = vdwg.mxu0
  %v582 = vadd.f32 %v510, %v573
  %v583 = vadd.f32 %v511, %v575
  %v584 = vadd.f32 %v512, %v578
  %v585 = vadd.f32 %v513, %v580
  %s586 = scalar_lea.vmem %s2, 80
  %v587 = vld [vmem:[%s586] sm:$0xf]
  %v588 = vld [vmem:[%s586 + $0x4] sm:$0xf]
  %v589 = vld [vmem:[%s586 + $0x8] sm:$0xf]
  %v590 = vld [vmem:[%s586 + $0xc] sm:$0xf]
  %v595 = vunpack.c.l.b16 %v587
  %v596 = vunpack.c.l.b16 %v588
  %v597 = vunpack.c.l.b16 %v589
  %v598 = vunpack.c.l.b16 %v590
  %v599 = vpack.c.b16 %v596, %v595
  %v600 = vpack.c.b16 %v598, %v597
  %603 = vmatpush.bf16.msra.mxu0 %v233
  %604 = vmatpush.bf16.msra.mxu0 %v232
  %605 = vmatpush.bf16.msra.mxu0 %v231
  %606 = vmatpush.bf16.msra.mxu0 %v230
  %607 = vmatpush.bf16.msra.mxu0 %v229
  %608 = vmatpush.bf16.msra.mxu0 %v228
  %609 = vmatpush.bf16.msra.mxu0 %v227
  %610 = vmatpush.bf16.msra.mxu0 %v226
  %611 = vmatmul.bf16.gmra.mxu0 %v599
  %v612 = vpop.f32.mrf.mxu0
  %v613 = vadd.f32 0.0, %v612
  %v614 = vpop.f32.mrf.mxu0
  %v615 = vadd.f32 0.0, %v614
  %616 = vmatmul.bf16.gmra.mxu0 %v600
  %v617 = vpop.f32.mrf.mxu0
  %v618 = vadd.f32 0.0, %v617
  %v619 = vpop.f32.mrf.mxu0
  %v620 = vadd.f32 0.0, %v619
  %621 = vdwg.mxu0
  %v622 = vpack.c.bf16 %v615, %v613
  %v623 = vpack.c.bf16 %v620, %v618
  %s624 = scalar_lea.vmem %s3, 20
  %v625 = vld [vmem:[%s624] sm:$0xf]
  %v627 = vsel %vm312, %v622, 0
  %v630 = vsel %vm312, %v623, 0
  %v633 = vsel %vm319, %v625, 0
  %635 = vmatpush.bf16.msra.mxu0 0
  %636 = vmatpush.bf16.msra.mxu0 0
  %637 = vmatpush.bf16.msra.mxu0 0
  %638 = vmatpush.bf16.msra.mxu0 0
  %639 = vmatpush.bf16.msra.mxu0 0
  %640 = vmatpush.bf16.msra.mxu0 0
  %641 = vmatpush.bf16.msra.mxu0 0
  %642 = vmatpush.bf16.msra.mxu0 %v633
  %643 = vmatmul.bf16.gmra.mxu0 %v627
  %v644 = vpop.f32.mrf.mxu0
  %v645 = vadd.f32 0.0, %v644
  %v646 = vpop.f32.mrf.mxu0
  %v647 = vadd.f32 0.0, %v646
  %648 = vmatmul.bf16.gmra.mxu0 %v630
  %v649 = vpop.f32.mrf.mxu0
  %v650 = vadd.f32 0.0, %v649
  %v651 = vpop.f32.mrf.mxu0
  %v652 = vadd.f32 0.0, %v651
  %653 = vdwg.mxu0
  %v654 = vadd.f32 %v582, %v645
  %v655 = vadd.f32 %v583, %v647
  %v656 = vadd.f32 %v584, %v650
  %v657 = vadd.f32 %v585, %v652
  %s658 = scalar_lea.vmem %s2, 96
  %v659 = vld [vmem:[%s658] sm:$0xf]
  %v660 = vld [vmem:[%s658 + $0x4] sm:$0xf]
  %v661 = vld [vmem:[%s658 + $0x8] sm:$0xf]
  %v662 = vld [vmem:[%s658 + $0xc] sm:$0xf]
  %v667 = vunpack.c.l.b16 %v659
  %v668 = vunpack.c.l.b16 %v660
  %v669 = vunpack.c.l.b16 %v661
  %v670 = vunpack.c.l.b16 %v662
  %v671 = vpack.c.b16 %v668, %v667
  %v672 = vpack.c.b16 %v670, %v669
  %675 = vmatpush.bf16.msra.mxu0 %v233
  %676 = vmatpush.bf16.msra.mxu0 %v232
  %677 = vmatpush.bf16.msra.mxu0 %v231
  %678 = vmatpush.bf16.msra.mxu0 %v230
  %679 = vmatpush.bf16.msra.mxu0 %v229
  %680 = vmatpush.bf16.msra.mxu0 %v228
  %681 = vmatpush.bf16.msra.mxu0 %v227
  %682 = vmatpush.bf16.msra.mxu0 %v226
  %683 = vmatmul.bf16.gmra.mxu0 %v671
  %v684 = vpop.f32.mrf.mxu0
  %v685 = vadd.f32 0.0, %v684
  %v686 = vpop.f32.mrf.mxu0
  %v687 = vadd.f32 0.0, %v686
  %688 = vmatmul.bf16.gmra.mxu0 %v672
  %v689 = vpop.f32.mrf.mxu0
  %v690 = vadd.f32 0.0, %v689
  %v691 = vpop.f32.mrf.mxu0
  %v692 = vadd.f32 0.0, %v691
  %693 = vdwg.mxu0
  %v694 = vpack.c.bf16 %v687, %v685
  %v695 = vpack.c.bf16 %v692, %v690
  %s696 = scalar_lea.vmem %s3, 24
  %v697 = vld [vmem:[%s696] sm:$0xf]
  %v699 = vsel %vm312, %v694, 0
  %v702 = vsel %vm312, %v695, 0
  %v705 = vsel %vm319, %v697, 0
  %707 = vmatpush.bf16.msra.mxu0 0
  %708 = vmatpush.bf16.msra.mxu0 0
  %709 = vmatpush.bf16.msra.mxu0 0
  %710 = vmatpush.bf16.msra.mxu0 0
  %711 = vmatpush.bf16.msra.mxu0 0
  %712 = vmatpush.bf16.msra.mxu0 0
  %713 = vmatpush.bf16.msra.mxu0 0
  %714 = vmatpush.bf16.msra.mxu0 %v705
  %715 = vmatmul.bf16.gmra.mxu0 %v699
  %v716 = vpop.f32.mrf.mxu0
  %v717 = vadd.f32 0.0, %v716
  %v718 = vpop.f32.mrf.mxu0
  %v719 = vadd.f32 0.0, %v718
  %720 = vmatmul.bf16.gmra.mxu0 %v702
  %v721 = vpop.f32.mrf.mxu0
  %v722 = vadd.f32 0.0, %v721
  %v723 = vpop.f32.mrf.mxu0
  %v724 = vadd.f32 0.0, %v723
  %725 = vdwg.mxu0
  %v726 = vadd.f32 %v654, %v717
  %v727 = vadd.f32 %v655, %v719
  %v728 = vadd.f32 %v656, %v722
  %v729 = vadd.f32 %v657, %v724
  %s730 = scalar_lea.vmem %s2, 112
  %v731 = vld [vmem:[%s730] sm:$0xf]
  %v732 = vld [vmem:[%s730 + $0x4] sm:$0xf]
  %v733 = vld [vmem:[%s730 + $0x8] sm:$0xf]
  %v734 = vld [vmem:[%s730 + $0xc] sm:$0xf]
  %v739 = vunpack.c.l.b16 %v731
  %v740 = vunpack.c.l.b16 %v732
  %v741 = vunpack.c.l.b16 %v733
  %v742 = vunpack.c.l.b16 %v734
  %v743 = vpack.c.b16 %v740, %v739
  %v744 = vpack.c.b16 %v742, %v741
  %747 = vmatpush.bf16.msra.mxu0 %v233
  %748 = vmatpush.bf16.msra.mxu0 %v232
  %749 = vmatpush.bf16.msra.mxu0 %v231
  %750 = vmatpush.bf16.msra.mxu0 %v230
  %751 = vmatpush.bf16.msra.mxu0 %v229
  %752 = vmatpush.bf16.msra.mxu0 %v228
  %753 = vmatpush.bf16.msra.mxu0 %v227
  %754 = vmatpush.bf16.msra.mxu0 %v226
  %755 = vmatmul.bf16.gmra.mxu0 %v743
  %v756 = vpop.f32.mrf.mxu0
  %v757 = vadd.f32 0.0, %v756
  %v758 = vpop.f32.mrf.mxu0
  %v759 = vadd.f32 0.0, %v758
  %760 = vmatmul.bf16.gmra.mxu0 %v744
  %v761 = vpop.f32.mrf.mxu0
  %v762 = vadd.f32 0.0, %v761
  %v763 = vpop.f32.mrf.mxu0
  %v764 = vadd.f32 0.0, %v763
  %765 = vdwg.mxu0
  %v766 = vpack.c.bf16 %v759, %v757
  %v767 = vpack.c.bf16 %v764, %v762
  %s768 = scalar_lea.vmem %s3, 28
  %v769 = vld [vmem:[%s768] sm:$0xf]
  %v771 = vsel %vm312, %v766, 0
  %v774 = vsel %vm312, %v767, 0
  %v777 = vsel %vm319, %v769, 0
  %779 = vmatpush.bf16.msra.mxu0 0
  %780 = vmatpush.bf16.msra.mxu0 0
  %781 = vmatpush.bf16.msra.mxu0 0
  %782 = vmatpush.bf16.msra.mxu0 0
  %783 = vmatpush.bf16.msra.mxu0 0
  %784 = vmatpush.bf16.msra.mxu0 0
  %785 = vmatpush.bf16.msra.mxu0 0
  %786 = vmatpush.bf16.msra.mxu0 %v777
  %787 = vmatmul.bf16.gmra.mxu0 %v771
  %v788 = vpop.f32.mrf.mxu0
  %v789 = vadd.f32 0.0, %v788
  %v790 = vpop.f32.mrf.mxu0
  %v791 = vadd.f32 0.0, %v790
  %792 = vmatmul.bf16.gmra.mxu0 %v774
  %v793 = vpop.f32.mrf.mxu0
  %v794 = vadd.f32 0.0, %v793
  %v795 = vpop.f32.mrf.mxu0
  %v796 = vadd.f32 0.0, %v795
  %797 = vdwg.mxu0
  %v798 = vadd.f32 %v726, %v789
  %v799 = vadd.f32 %v727, %v791
  %v800 = vadd.f32 %v728, %v794
  %v801 = vadd.f32 %v729, %v796
  %s802 = scalar_lea.vmem %s2, 128
  %v803 = vld [vmem:[%s802] sm:$0xf]
  %v804 = vld [vmem:[%s802 + $0x4] sm:$0xf]
  %v805 = vld [vmem:[%s802 + $0x8] sm:$0xf]
  %v806 = vld [vmem:[%s802 + $0xc] sm:$0xf]
  %v811 = vunpack.c.l.b16 %v803
  %v812 = vunpack.c.l.b16 %v804
  %v813 = vunpack.c.l.b16 %v805
  %v814 = vunpack.c.l.b16 %v806
  %v815 = vpack.c.b16 %v812, %v811
  %v816 = vpack.c.b16 %v814, %v813
  %819 = vmatpush.bf16.msra.mxu0 %v233
  %820 = vmatpush.bf16.msra.mxu0 %v232
  %821 = vmatpush.bf16.msra.mxu0 %v231
  %822 = vmatpush.bf16.msra.mxu0 %v230
  %823 = vmatpush.bf16.msra.mxu0 %v229
  %824 = vmatpush.bf16.msra.mxu0 %v228
  %825 = vmatpush.bf16.msra.mxu0 %v227
  %826 = vmatpush.bf16.msra.mxu0 %v226
  %827 = vmatmul.bf16.gmra.mxu0 %v815
  %v828 = vpop.f32.mrf.mxu0
  %v829 = vadd.f32 0.0, %v828
  %v830 = vpop.f32.mrf.mxu0
  %v831 = vadd.f32 0.0, %v830
  %832 = vmatmul.bf16.gmra.mxu0 %v816
  %v833 = vpop.f32.mrf.mxu0
  %v834 = vadd.f32 0.0, %v833
  %v835 = vpop.f32.mrf.mxu0
  %v836 = vadd.f32 0.0, %v835
  %837 = vdwg.mxu0
  %v838 = vpack.c.bf16 %v831, %v829
  %v839 = vpack.c.bf16 %v836, %v834
  %s840 = scalar_lea.vmem %s3, 32
  %v841 = vld [vmem:[%s840] sm:$0xf]
  %v843 = vsel %vm312, %v838, 0
  %v846 = vsel %vm312, %v839, 0
  %v849 = vsel %vm319, %v841, 0
  %851 = vmatpush.bf16.msra.mxu0 0
  %852 = vmatpush.bf16.msra.mxu0 0
  %853 = vmatpush.bf16.msra.mxu0 0
  %854 = vmatpush.bf16.msra.mxu0 0
  %855 = vmatpush.bf16.msra.mxu0 0
  %856 = vmatpush.bf16.msra.mxu0 0
  %857 = vmatpush.bf16.msra.mxu0 0
  %858 = vmatpush.bf16.msra.mxu0 %v849
  %859 = vmatmul.bf16.gmra.mxu0 %v843
  %v860 = vpop.f32.mrf.mxu0
  %v861 = vadd.f32 0.0, %v860
  %v862 = vpop.f32.mrf.mxu0
  %v863 = vadd.f32 0.0, %v862
  %864 = vmatmul.bf16.gmra.mxu0 %v846
  %v865 = vpop.f32.mrf.mxu0
  %v866 = vadd.f32 0.0, %v865
  %v867 = vpop.f32.mrf.mxu0
  %v868 = vadd.f32 0.0, %v867
  %869 = vdwg.mxu0
  %v870 = vadd.f32 %v798, %v861
  %v871 = vadd.f32 %v799, %v863
  %v872 = vadd.f32 %v800, %v866
  %v873 = vadd.f32 %v801, %v868
  %s874 = scalar_lea.vmem %s2, 144
  %v875 = vld [vmem:[%s874] sm:$0xf]
  %v876 = vld [vmem:[%s874 + $0x4] sm:$0xf]
  %v877 = vld [vmem:[%s874 + $0x8] sm:$0xf]
  %v878 = vld [vmem:[%s874 + $0xc] sm:$0xf]
  %v883 = vunpack.c.l.b16 %v875
  %v884 = vunpack.c.l.b16 %v876
  %v885 = vunpack.c.l.b16 %v877
  %v886 = vunpack.c.l.b16 %v878
  %v887 = vpack.c.b16 %v884, %v883
  %v888 = vpack.c.b16 %v886, %v885
  %891 = vmatpush.bf16.msra.mxu0 %v233
  %892 = vmatpush.bf16.msra.mxu0 %v232
  %893 = vmatpush.bf16.msra.mxu0 %v231
  %894 = vmatpush.bf16.msra.mxu0 %v230
  %895 = vmatpush.bf16.msra.mxu0 %v229
  %896 = vmatpush.bf16.msra.mxu0 %v228
  %897 = vmatpush.bf16.msra.mxu0 %v227
  %898 = vmatpush.bf16.msra.mxu0 %v226
  %899 = vmatmul.bf16.gmra.mxu0 %v887
  %v900 = vpop.f32.mrf.mxu0
  %v901 = vadd.f32 0.0, %v900
  %v902 = vpop.f32.mrf.mxu0
  %v903 = vadd.f32 0.0, %v902
  %904 = vmatmul.bf16.gmra.mxu0 %v888
  %v905 = vpop.f32.mrf.mxu0
  %v906 = vadd.f32 0.0, %v905
  %v907 = vpop.f32.mrf.mxu0
  %v908 = vadd.f32 0.0, %v907
  %909 = vdwg.mxu0
  %v910 = vpack.c.bf16 %v903, %v901
  %v911 = vpack.c.bf16 %v908, %v906
  %s912 = scalar_lea.vmem %s3, 36
  %v913 = vld [vmem:[%s912] sm:$0xf]
  %v915 = vsel %vm312, %v910, 0
  %v918 = vsel %vm312, %v911, 0
  %v921 = vsel %vm319, %v913, 0
  %923 = vmatpush.bf16.msra.mxu0 0
  %924 = vmatpush.bf16.msra.mxu0 0
  %925 = vmatpush.bf16.msra.mxu0 0
  %926 = vmatpush.bf16.msra.mxu0 0
  %927 = vmatpush.bf16.msra.mxu0 0
  %928 = vmatpush.bf16.msra.mxu0 0
  %929 = vmatpush.bf16.msra.mxu0 0
  %930 = vmatpush.bf16.msra.mxu0 %v921
  %931 = vmatmul.bf16.gmra.mxu0 %v915
  %v932 = vpop.f32.mrf.mxu0
  %v933 = vadd.f32 0.0, %v932
  %v934 = vpop.f32.mrf.mxu0
  %v935 = vadd.f32 0.0, %v934
  %936 = vmatmul.bf16.gmra.mxu0 %v918
  %v937 = vpop.f32.mrf.mxu0
  %v938 = vadd.f32 0.0, %v937
  %v939 = vpop.f32.mrf.mxu0
  %v940 = vadd.f32 0.0, %v939
  %941 = vdwg.mxu0
  %v942 = vadd.f32 %v870, %v933
  %v943 = vadd.f32 %v871, %v935
  %v944 = vadd.f32 %v872, %v938
  %v945 = vadd.f32 %v873, %v940
  %s946 = scalar_lea.vmem %s2, 160
  %v947 = vld [vmem:[%s946] sm:$0xf]
  %v948 = vld [vmem:[%s946 + $0x4] sm:$0xf]
  %v949 = vld [vmem:[%s946 + $0x8] sm:$0xf]
  %v950 = vld [vmem:[%s946 + $0xc] sm:$0xf]
  %v955 = vunpack.c.l.b16 %v947
  %v956 = vunpack.c.l.b16 %v948
  %v957 = vunpack.c.l.b16 %v949
  %v958 = vunpack.c.l.b16 %v950
  %v959 = vpack.c.b16 %v956, %v955
  %v960 = vpack.c.b16 %v958, %v957
  %963 = vmatpush.bf16.msra.mxu0 %v233
  %964 = vmatpush.bf16.msra.mxu0 %v232
  %965 = vmatpush.bf16.msra.mxu0 %v231
  %966 = vmatpush.bf16.msra.mxu0 %v230
  %967 = vmatpush.bf16.msra.mxu0 %v229
  %968 = vmatpush.bf16.msra.mxu0 %v228
  %969 = vmatpush.bf16.msra.mxu0 %v227
  %970 = vmatpush.bf16.msra.mxu0 %v226
  %971 = vmatmul.bf16.gmra.mxu0 %v959
  %v972 = vpop.f32.mrf.mxu0
  %v973 = vadd.f32 0.0, %v972
  %v974 = vpop.f32.mrf.mxu0
  %v975 = vadd.f32 0.0, %v974
  %976 = vmatmul.bf16.gmra.mxu0 %v960
  %v977 = vpop.f32.mrf.mxu0
  %v978 = vadd.f32 0.0, %v977
  %v979 = vpop.f32.mrf.mxu0
  %v980 = vadd.f32 0.0, %v979
  %981 = vdwg.mxu0
  %v982 = vpack.c.bf16 %v975, %v973
  %v983 = vpack.c.bf16 %v980, %v978
  %s984 = scalar_lea.vmem %s3, 40
  %v985 = vld [vmem:[%s984] sm:$0xf]
  %v987 = vsel %vm312, %v982, 0
  %v990 = vsel %vm312, %v983, 0
  %v993 = vsel %vm319, %v985, 0
  %995 = vmatpush.bf16.msra.mxu0 0
  %996 = vmatpush.bf16.msra.mxu0 0
  %997 = vmatpush.bf16.msra.mxu0 0
  %998 = vmatpush.bf16.msra.mxu0 0
  %999 = vmatpush.bf16.msra.mxu0 0
  %1000 = vmatpush.bf16.msra.mxu0 0
  %1001 = vmatpush.bf16.msra.mxu0 0
  %1002 = vmatpush.bf16.msra.mxu0 %v993
  %1003 = vmatmul.bf16.gmra.mxu0 %v987
  %v1004 = vpop.f32.mrf.mxu0
  %v1005 = vadd.f32 0.0, %v1004
  %v1006 = vpop.f32.mrf.mxu0
  %v1007 = vadd.f32 0.0, %v1006
  %1008 = vmatmul.bf16.gmra.mxu0 %v990
  %v1009 = vpop.f32.mrf.mxu0
  %v1010 = vadd.f32 0.0, %v1009
  %v1011 = vpop.f32.mrf.mxu0
  %v1012 = vadd.f32 0.0, %v1011
  %1013 = vdwg.mxu0
  %v1014 = vadd.f32 %v942, %v1005
  %v1015 = vadd.f32 %v943, %v1007
  %v1016 = vadd.f32 %v944, %v1010
  %v1017 = vadd.f32 %v945, %v1012
  %s1018 = scalar_lea.vmem %s2, 176
  %v1019 = vld [vmem:[%s1018] sm:$0xf]
  %v1020 = vld [vmem:[%s1018 + $0x4] sm:$0xf]
  %v1021 = vld [vmem:[%s1018 + $0x8] sm:$0xf]
  %v1022 = vld [vmem:[%s1018 + $0xc] sm:$0xf]
  %v1027 = vunpack.c.l.b16 %v1019
  %v1028 = vunpack.c.l.b16 %v1020
  %v1029 = vunpack.c.l.b16 %v1021
  %v1030 = vunpack.c.l.b16 %v1022
  %v1031 = vpack.c.b16 %v1028, %v1027
  %v1032 = vpack.c.b16 %v1030, %v1029
  %1035 = vmatpush.bf16.msra.mxu0 %v233
  %1036 = vmatpush.bf16.msra.mxu0 %v232
  %1037 = vmatpush.bf16.msra.mxu0 %v231
  %1038 = vmatpush.bf16.msra.mxu0 %v230
  %1039 = vmatpush.bf16.msra.mxu0 %v229
  %1040 = vmatpush.bf16.msra.mxu0 %v228
  %1041 = vmatpush.bf16.msra.mxu0 %v227
  %1042 = vmatpush.bf16.msra.mxu0 %v226
  %1043 = vmatmul.bf16.gmra.mxu0 %v1031
  %v1044 = vpop.f32.mrf.mxu0
  %v1045 = vadd.f32 0.0, %v1044
  %v1046 = vpop.f32.mrf.mxu0
  %v1047 = vadd.f32 0.0, %v1046
  %1048 = vmatmul.bf16.gmra.mxu0 %v1032
  %v1049 = vpop.f32.mrf.mxu0
  %v1050 = vadd.f32 0.0, %v1049
  %v1051 = vpop.f32.mrf.mxu0
  %v1052 = vadd.f32 0.0, %v1051
  %1053 = vdwg.mxu0
  %v1054 = vpack.c.bf16 %v1047, %v1045
  %v1055 = vpack.c.bf16 %v1052, %v1050
  %s1056 = scalar_lea.vmem %s3, 44
  %v1057 = vld [vmem:[%s1056] sm:$0xf]
  %v1059 = vsel %vm312, %v1054, 0
  %v1062 = vsel %vm312, %v1055, 0
  %v1065 = vsel %vm319, %v1057, 0
  %1067 = vmatpush.bf16.msra.mxu0 0
  %1068 = vmatpush.bf16.msra.mxu0 0
  %1069 = vmatpush.bf16.msra.mxu0 0
  %1070 = vmatpush.bf16.msra.mxu0 0
  %1071 = vmatpush.bf16.msra.mxu0 0
  %1072 = vmatpush.bf16.msra.mxu0 0
  %1073 = vmatpush.bf16.msra.mxu0 0
  %1074 = vmatpush.bf16.msra.mxu0 %v1065
  %1075 = vmatmul.bf16.gmra.mxu0 %v1059
  %v1076 = vpop.f32.mrf.mxu0
  %v1077 = vadd.f32 0.0, %v1076
  %v1078 = vpop.f32.mrf.mxu0
  %v1079 = vadd.f32 0.0, %v1078
  %1080 = vmatmul.bf16.gmra.mxu0 %v1062
  %v1081 = vpop.f32.mrf.mxu0
  %v1082 = vadd.f32 0.0, %v1081
  %v1083 = vpop.f32.mrf.mxu0
  %v1084 = vadd.f32 0.0, %v1083
  %1085 = vdwg.mxu0
  %v1086 = vadd.f32 %v1014, %v1077
  %v1087 = vadd.f32 %v1015, %v1079
  %v1088 = vadd.f32 %v1016, %v1082
  %v1089 = vadd.f32 %v1017, %v1084
  %s1090 = scalar_lea.vmem %s2, 192
  %v1091 = vld [vmem:[%s1090] sm:$0xf]
  %v1092 = vld [vmem:[%s1090 + $0x4] sm:$0xf]
  %v1093 = vld [vmem:[%s1090 + $0x8] sm:$0xf]
  %v1094 = vld [vmem:[%s1090 + $0xc] sm:$0xf]
  %v1099 = vunpack.c.l.b16 %v1091
  %v1100 = vunpack.c.l.b16 %v1092
  %v1101 = vunpack.c.l.b16 %v1093
  %v1102 = vunpack.c.l.b16 %v1094
  %v1103 = vpack.c.b16 %v1100, %v1099
  %v1104 = vpack.c.b16 %v1102, %v1101
  %1107 = vmatpush.bf16.msra.mxu0 %v233
  %1108 = vmatpush.bf16.msra.mxu0 %v232
  %1109 = vmatpush.bf16.msra.mxu0 %v231
  %1110 = vmatpush.bf16.msra.mxu0 %v230
  %1111 = vmatpush.bf16.msra.mxu0 %v229
  %1112 = vmatpush.bf16.msra.mxu0 %v228
  %1113 = vmatpush.bf16.msra.mxu0 %v227
  %1114 = vmatpush.bf16.msra.mxu0 %v226
  %1115 = vmatmul.bf16.gmra.mxu0 %v1103
  %v1116 = vpop.f32.mrf.mxu0
  %v1117 = vadd.f32 0.0, %v1116
  %v1118 = vpop.f32.mrf.mxu0
  %v1119 = vadd.f32 0.0, %v1118
  %1120 = vmatmul.bf16.gmra.mxu0 %v1104
  %v1121 = vpop.f32.mrf.mxu0
  %v1122 = vadd.f32 0.0, %v1121
  %v1123 = vpop.f32.mrf.mxu0
  %v1124 = vadd.f32 0.0, %v1123
  %1125 = vdwg.mxu0
  %v1126 = vpack.c.bf16 %v1119, %v1117
  %v1127 = vpack.c.bf16 %v1124, %v1122
  %s1128 = scalar_lea.vmem %s3, 48
  %v1129 = vld [vmem:[%s1128] sm:$0xf]
  %v1131 = vsel %vm312, %v1126, 0
  %v1134 = vsel %vm312, %v1127, 0
  %v1137 = vsel %vm319, %v1129, 0
  %1139 = vmatpush.bf16.msra.mxu0 0
  %1140 = vmatpush.bf16.msra.mxu0 0
  %1141 = vmatpush.bf16.msra.mxu0 0
  %1142 = vmatpush.bf16.msra.mxu0 0
  %1143 = vmatpush.bf16.msra.mxu0 0
  %1144 = vmatpush.bf16.msra.mxu0 0
  %1145 = vmatpush.bf16.msra.mxu0 0
  %1146 = vmatpush.bf16.msra.mxu0 %v1137
  %1147 = vmatmul.bf16.gmra.mxu0 %v1131
  %v1148 = vpop.f32.mrf.mxu0
  %v1149 = vadd.f32 0.0, %v1148
  %v1150 = vpop.f32.mrf.mxu0
  %v1151 = vadd.f32 0.0, %v1150
  %1152 = vmatmul.bf16.gmra.mxu0 %v1134
  %v1153 = vpop.f32.mrf.mxu0
  %v1154 = vadd.f32 0.0, %v1153
  %v1155 = vpop.f32.mrf.mxu0
  %v1156 = vadd.f32 0.0, %v1155
  %1157 = vdwg.mxu0
  %v1158 = vadd.f32 %v1086, %v1149
  %v1159 = vadd.f32 %v1087, %v1151
  %v1160 = vadd.f32 %v1088, %v1154
  %v1161 = vadd.f32 %v1089, %v1156
  %s1162 = scalar_lea.vmem %s2, 208
  %v1163 = vld [vmem:[%s1162] sm:$0xf]
  %v1164 = vld [vmem:[%s1162 + $0x4] sm:$0xf]
  %v1165 = vld [vmem:[%s1162 + $0x8] sm:$0xf]
  %v1166 = vld [vmem:[%s1162 + $0xc] sm:$0xf]
  %v1171 = vunpack.c.l.b16 %v1163
  %v1172 = vunpack.c.l.b16 %v1164
  %v1173 = vunpack.c.l.b16 %v1165
  %v1174 = vunpack.c.l.b16 %v1166
  %v1175 = vpack.c.b16 %v1172, %v1171
  %v1176 = vpack.c.b16 %v1174, %v1173
  %1179 = vmatpush.bf16.msra.mxu0 %v233
  %1180 = vmatpush.bf16.msra.mxu0 %v232
  %1181 = vmatpush.bf16.msra.mxu0 %v231
  %1182 = vmatpush.bf16.msra.mxu0 %v230
  %1183 = vmatpush.bf16.msra.mxu0 %v229
  %1184 = vmatpush.bf16.msra.mxu0 %v228
  %1185 = vmatpush.bf16.msra.mxu0 %v227
  %1186 = vmatpush.bf16.msra.mxu0 %v226
  %1187 = vmatmul.bf16.gmra.mxu0 %v1175
  %v1188 = vpop.f32.mrf.mxu0
  %v1189 = vadd.f32 0.0, %v1188
  %v1190 = vpop.f32.mrf.mxu0
  %v1191 = vadd.f32 0.0, %v1190
  %1192 = vmatmul.bf16.gmra.mxu0 %v1176
  %v1193 = vpop.f32.mrf.mxu0
  %v1194 = vadd.f32 0.0, %v1193
  %v1195 = vpop.f32.mrf.mxu0
  %v1196 = vadd.f32 0.0, %v1195
  %1197 = vdwg.mxu0
  %v1198 = vpack.c.bf16 %v1191, %v1189
  %v1199 = vpack.c.bf16 %v1196, %v1194
  %s1200 = scalar_lea.vmem %s3, 52
  %v1201 = vld [vmem:[%s1200] sm:$0xf]
  %v1203 = vsel %vm312, %v1198, 0
  %v1206 = vsel %vm312, %v1199, 0
  %v1209 = vsel %vm319, %v1201, 0
  %1211 = vmatpush.bf16.msra.mxu0 0
  %1212 = vmatpush.bf16.msra.mxu0 0
  %1213 = vmatpush.bf16.msra.mxu0 0
  %1214 = vmatpush.bf16.msra.mxu0 0
  %1215 = vmatpush.bf16.msra.mxu0 0
  %1216 = vmatpush.bf16.msra.mxu0 0
  %1217 = vmatpush.bf16.msra.mxu0 0
  %1218 = vmatpush.bf16.msra.mxu0 %v1209
  %1219 = vmatmul.bf16.gmra.mxu0 %v1203
  %v1220 = vpop.f32.mrf.mxu0
  %v1221 = vadd.f32 0.0, %v1220
  %v1222 = vpop.f32.mrf.mxu0
  %v1223 = vadd.f32 0.0, %v1222
  %1224 = vmatmul.bf16.gmra.mxu0 %v1206
  %v1225 = vpop.f32.mrf.mxu0
  %v1226 = vadd.f32 0.0, %v1225
  %v1227 = vpop.f32.mrf.mxu0
  %v1228 = vadd.f32 0.0, %v1227
  %1229 = vdwg.mxu0
  %v1230 = vadd.f32 %v1158, %v1221
  %v1231 = vadd.f32 %v1159, %v1223
  %v1232 = vadd.f32 %v1160, %v1226
  %v1233 = vadd.f32 %v1161, %v1228
  %s1234 = scalar_lea.vmem %s2, 224
  %v1235 = vld [vmem:[%s1234] sm:$0xf]
  %v1236 = vld [vmem:[%s1234 + $0x4] sm:$0xf]
  %v1237 = vld [vmem:[%s1234 + $0x8] sm:$0xf]
  %v1238 = vld [vmem:[%s1234 + $0xc] sm:$0xf]
  %v1243 = vunpack.c.l.b16 %v1235
  %v1244 = vunpack.c.l.b16 %v1236
  %v1245 = vunpack.c.l.b16 %v1237
  %v1246 = vunpack.c.l.b16 %v1238
  %v1247 = vpack.c.b16 %v1244, %v1243
  %v1248 = vpack.c.b16 %v1246, %v1245
  %1251 = vmatpush.bf16.msra.mxu0 %v233
  %1252 = vmatpush.bf16.msra.mxu0 %v232
  %1253 = vmatpush.bf16.msra.mxu0 %v231
  %1254 = vmatpush.bf16.msra.mxu0 %v230
  %1255 = vmatpush.bf16.msra.mxu0 %v229
  %1256 = vmatpush.bf16.msra.mxu0 %v228
  %1257 = vmatpush.bf16.msra.mxu0 %v227
  %1258 = vmatpush.bf16.msra.mxu0 %v226
  %1259 = vmatmul.bf16.gmra.mxu0 %v1247
  %v1260 = vpop.f32.mrf.mxu0
  %v1261 = vadd.f32 0.0, %v1260
  %v1262 = vpop.f32.mrf.mxu0
  %v1263 = vadd.f32 0.0, %v1262
  %1264 = vmatmul.bf16.gmra.mxu0 %v1248
  %v1265 = vpop.f32.mrf.mxu0
  %v1266 = vadd.f32 0.0, %v1265
  %v1267 = vpop.f32.mrf.mxu0
  %v1268 = vadd.f32 0.0, %v1267
  %1269 = vdwg.mxu0
  %v1270 = vpack.c.bf16 %v1263, %v1261
  %v1271 = vpack.c.bf16 %v1268, %v1266
  %s1272 = scalar_lea.vmem %s3, 56
  %v1273 = vld [vmem:[%s1272] sm:$0xf]
  %v1275 = vsel %vm312, %v1270, 0
  %v1278 = vsel %vm312, %v1271, 0
  %v1281 = vsel %vm319, %v1273, 0
  %1283 = vmatpush.bf16.msra.mxu0 0
  %1284 = vmatpush.bf16.msra.mxu0 0
  %1285 = vmatpush.bf16.msra.mxu0 0
  %1286 = vmatpush.bf16.msra.mxu0 0
  %1287 = vmatpush.bf16.msra.mxu0 0
  %1288 = vmatpush.bf16.msra.mxu0 0
  %1289 = vmatpush.bf16.msra.mxu0 0
  %1290 = vmatpush.bf16.msra.mxu0 %v1281
  %1291 = vmatmul.bf16.gmra.mxu0 %v1275
  %v1292 = vpop.f32.mrf.mxu0
  %v1293 = vadd.f32 0.0, %v1292
  %v1294 = vpop.f32.mrf.mxu0
  %v1295 = vadd.f32 0.0, %v1294
  %1296 = vmatmul.bf16.gmra.mxu0 %v1278
  %v1297 = vpop.f32.mrf.mxu0
  %v1298 = vadd.f32 0.0, %v1297
  %v1299 = vpop.f32.mrf.mxu0
  %v1300 = vadd.f32 0.0, %v1299
  %1301 = vdwg.mxu0
  %v1302 = vadd.f32 %v1230, %v1293
  %v1303 = vadd.f32 %v1231, %v1295
  %v1304 = vadd.f32 %v1232, %v1298
  %v1305 = vadd.f32 %v1233, %v1300
  %s1306 = scalar_lea.vmem %s2, 240
  %v1307 = vld [vmem:[%s1306] sm:$0xf]
  %v1308 = vld [vmem:[%s1306 + $0x4] sm:$0xf]
  %v1309 = vld [vmem:[%s1306 + $0x8] sm:$0xf]
  %v1310 = vld [vmem:[%s1306 + $0xc] sm:$0xf]
  %v1315 = vunpack.c.l.b16 %v1307
  %v1316 = vunpack.c.l.b16 %v1308
  %v1317 = vunpack.c.l.b16 %v1309
  %v1318 = vunpack.c.l.b16 %v1310
  %v1319 = vpack.c.b16 %v1316, %v1315
  %v1320 = vpack.c.b16 %v1318, %v1317
  %1323 = vmatpush.bf16.msra.mxu0 %v233
  %1324 = vmatpush.bf16.msra.mxu0 %v232
  %1325 = vmatpush.bf16.msra.mxu0 %v231
  %1326 = vmatpush.bf16.msra.mxu0 %v230
  %1327 = vmatpush.bf16.msra.mxu0 %v229
  %1328 = vmatpush.bf16.msra.mxu0 %v228
  %1329 = vmatpush.bf16.msra.mxu0 %v227
  %1330 = vmatpush.bf16.msra.mxu0 %v226
  %1331 = vmatmul.bf16.gmra.mxu0 %v1319
  %v1332 = vpop.f32.mrf.mxu0
  %v1333 = vadd.f32 0.0, %v1332
  %v1334 = vpop.f32.mrf.mxu0
  %v1335 = vadd.f32 0.0, %v1334
  %1336 = vmatmul.bf16.gmra.mxu0 %v1320
  %v1337 = vpop.f32.mrf.mxu0
  %v1338 = vadd.f32 0.0, %v1337
  %v1339 = vpop.f32.mrf.mxu0
  %v1340 = vadd.f32 0.0, %v1339
  %1341 = vdwg.mxu0
  %v1342 = vpack.c.bf16 %v1335, %v1333
  %v1343 = vpack.c.bf16 %v1340, %v1338
  %s1344 = scalar_lea.vmem %s3, 60
  %v1345 = vld [vmem:[%s1344] sm:$0xf]
  %v1347 = vsel %vm312, %v1342, 0
  %v1350 = vsel %vm312, %v1343, 0
  %v1353 = vsel %vm319, %v1345, 0
  %1355 = vmatpush.bf16.msra.mxu0 0
  %1356 = vmatpush.bf16.msra.mxu0 0
  %1357 = vmatpush.bf16.msra.mxu0 0
  %1358 = vmatpush.bf16.msra.mxu0 0
  %1359 = vmatpush.bf16.msra.mxu0 0
  %1360 = vmatpush.bf16.msra.mxu0 0
  %1361 = vmatpush.bf16.msra.mxu0 0
  %1362 = vmatpush.bf16.msra.mxu0 %v1353
  %1363 = vmatmul.bf16.gmra.mxu0 %v1347
  %v1364 = vpop.f32.mrf.mxu0
  %v1365 = vadd.f32 0.0, %v1364
  %v1366 = vpop.f32.mrf.mxu0
  %v1367 = vadd.f32 0.0, %v1366
  %1368 = vmatmul.bf16.gmra.mxu0 %v1350
  %v1369 = vpop.f32.mrf.mxu0
  %v1370 = vadd.f32 0.0, %v1369
  %v1371 = vpop.f32.mrf.mxu0
  %v1372 = vadd.f32 0.0, %v1371
  %1373 = vdwg.mxu0
  %v1374 = vadd.f32 %v1302, %v1365
  %v1375 = vadd.f32 %v1303, %v1367
  %v1376 = vadd.f32 %v1304, %v1370
  %v1377 = vadd.f32 %v1305, %v1372
  %vm1378 = vcmask 130048
  %v1379 = vsel %vm1378, %v1374, 0.0
  %v1380 = vsel %vm1378, %v1375, 0.0
  %v1381 = vadd.f32 %v1379, %v1380
  %v1382 = vsel %vm1378, %v1376, 0.0
  %v1383 = vadd.f32 %v1381, %v1382
  %v1384 = vsel %vm1378, %v1377, 0.0
  %v1385 = vadd.f32 %v1383, %v1384
  %v1386 = vrot.slane %v1385, 4
  %v1387 = vadd.f32 %v1385, %v1386
  %v1388 = vrot.slane %v1387, 2
  %v1389 = vadd.f32 %v1387, %v1388
  %v1390 = vrot.slane %v1389, 1
  %v1391 = vadd.f32 %v1389, %v1390
  %v1392 = vrcp.pop 32.0
  %v1393 = vmul.f32 32.0, %v1392
  %v1394 = vsub.f32 1.0, %v1393
  %v1395 = vmul.f32 %v1392, %v1394
  %v1396 = vadd.f32 %v1392, %v1395
  %vm1397 = vweird.f32 %v1392
  %v1398 = vsel %vm1397, %v1392, %v1396
  %v1399 = vmul.f32 %v1391, %v1398
  %v1400 = vsub.f32 %v1374, %v1399
  %v1401 = vsub.f32 %v1375, %v1399
  %v1402 = vsub.f32 %v1376, %v1399
  %v1403 = vsub.f32 %v1377, %v1399
  %v1404 = vmul.f32 %v1400, %v1400
  %v1405 = vmul.f32 %v1401, %v1401
  %v1406 = vmul.f32 %v1402, %v1402
  %v1407 = vmul.f32 %v1403, %v1403
  %v1408 = vsel %vm1378, %v1404, 0.0
  %v1409 = vsel %vm1378, %v1405, 0.0
  %v1410 = vadd.f32 %v1408, %v1409
  %v1411 = vsel %vm1378, %v1406, 0.0
  %v1412 = vadd.f32 %v1410, %v1411
  %v1413 = vsel %vm1378, %v1407, 0.0
  %v1414 = vadd.f32 %v1412, %v1413
  %v1415 = vrot.slane %v1414, 4
  %v1416 = vadd.f32 %v1414, %v1415
  %v1417 = vrot.slane %v1416, 2
  %v1418 = vadd.f32 %v1416, %v1417
  %v1419 = vrot.slane %v1418, 1
  %v1420 = vadd.f32 %v1418, %v1419
  %v1421 = vmul.f32 %v1420, %v1398
  %v1422 = vadd.f32 %v1421, 1e-05
  %v1423 = vrsqrt.pop %v1422
  %v1424 = vmul.f32 %v1423, %v1422
  %v1425 = vmul.f32 %v1424, %v1423
  %v1426 = vmul.f32 0.5, %v1425
  %v1427 = vsub.f32 1.5, %v1426
  %v1428 = vmul.f32 %v1423, %v1427
  %vm1429 = vweird.f32 %v1422
  %vm1430 = vweird.f32 %v1423
  %vm1431 = vmor %vm1429, %vm1430
  %v1432 = vsel %vm1431, %v1423, %v1428
  %v1433 = vmul.f32 %v1400, %v1432
  %v1434 = vmul.f32 %v1401, %v1432
  %v1435 = vmul.f32 %v1402, %v1432
  %v1436 = vmul.f32 %v1403, %v1432
  %vm1437 = vcmp.ge.f32.partialorder %v1433, 0.0
  %vm1438 = vcmp.ge.f32.partialorder %v1434, 0.0
  %vm1439 = vcmp.ge.f32.partialorder %v1435, 0.0
  %vm1440 = vcmp.ge.f32.partialorder %v1436, 0.0
  %v1441 = vmul.f32 %v1433, 0.2
  %v1442 = vmul.f32 %v1434, 0.2
  %v1443 = vmul.f32 %v1435, 0.2
  %v1444 = vmul.f32 %v1436, 0.2
  %v1445 = vsel %vm1437, %v1433, %v1441
  %v1446 = vsel %vm1438, %v1434, %v1442
  %v1447 = vsel %vm1439, %v1435, %v1443
  %v1448 = vsel %vm1440, %v1436, %v1444
  %v1449 = vpack.c.bf16 %v1446, %v1445
  %v1450 = vpack.c.bf16 %v1448, %v1447
  %v1451 = vld [vmem:[%s4] sm:$0x1]
  %vm1452 = vcmask 261120
  %v1454 = vsel %vm1452, %v1451, 0
  %1456 = vmatpush.bf16.msra.mxu0 0
  %1457 = vmatpush.bf16.msra.mxu0 0
  %1458 = vmatpush.bf16.msra.mxu0 0
  %1459 = vmatpush.bf16.msra.mxu0 0
  %1460 = vmatpush.bf16.msra.mxu0 0
  %1461 = vmatpush.bf16.msra.mxu0 0
  %1462 = vmatpush.bf16.msra.mxu0 %v1450
  %1463 = vmatpush.bf16.msra.mxu0 %v1449
  %1464 = vmatmul.bf16.gmra.mxu0 %v1454
  %v1465 = vpop.f32.mrf.mxu0
  %v1466 = vadd.f32 0.0, %v1465
  %v1467 = vpop.f32.mrf.mxu0
  %1468 = vdwg.mxu0
  %v1469 = vld [vmem:[%s5] sm:$0x1]
  %v1470 = vunpack.c.l.bf16 %v1469
  %v1471 = vperm.slane %v1470, 0
  %v1472 = vmul.f32 %v1466, %v1471
  %v1473 = vadd.f32 %v1472, 0.0
  %s1474 = scalar_lea.vmem %s4, 1
  %v1475 = vld [vmem:[%s1474] sm:$0x1]
  %v1477 = vsel %vm1452, %v1475, 0
  %1479 = vmatpush.bf16.msra.mxu0 0
  %1480 = vmatpush.bf16.msra.mxu0 0
  %1481 = vmatpush.bf16.msra.mxu0 0
  %1482 = vmatpush.bf16.msra.mxu0 0
  %1483 = vmatpush.bf16.msra.mxu0 0
  %1484 = vmatpush.bf16.msra.mxu0 0
  %1485 = vmatpush.bf16.msra.mxu0 %v1450
  %1486 = vmatpush.bf16.msra.mxu0 %v1449
  %1487 = vmatmul.bf16.gmra.mxu0 %v1477
  %v1488 = vpop.f32.mrf.mxu0
  %v1489 = vadd.f32 0.0, %v1488
  %v1490 = vpop.f32.mrf.mxu0
  %1491 = vdwg.mxu0
  %s1492 = scalar_lea.vmem %s5, 1
  %v1493 = vld [vmem:[%s1492] sm:$0x1]
  %v1494 = vunpack.c.l.bf16 %v1493
  %v1495 = vperm.slane %v1494, 0
  %v1496 = vmul.f32 %v1489, %v1495
  %v1497 = vadd.f32 %v1473, %v1496
  %s1498 = scalar_lea.vmem %s4, 2
  %v1499 = vld [vmem:[%s1498] sm:$0x1]
  %v1501 = vsel %vm1452, %v1499, 0
  %1503 = vmatpush.bf16.msra.mxu0 0
  %1504 = vmatpush.bf16.msra.mxu0 0
  %1505 = vmatpush.bf16.msra.mxu0 0
  %1506 = vmatpush.bf16.msra.mxu0 0
  %1507 = vmatpush.bf16.msra.mxu0 0
  %1508 = vmatpush.bf16.msra.mxu0 0
  %1509 = vmatpush.bf16.msra.mxu0 %v1450
  %1510 = vmatpush.bf16.msra.mxu0 %v1449
  %1511 = vmatmul.bf16.gmra.mxu0 %v1501
  %v1512 = vpop.f32.mrf.mxu0
  %v1513 = vadd.f32 0.0, %v1512
  %v1514 = vpop.f32.mrf.mxu0
  %1515 = vdwg.mxu0
  %s1516 = scalar_lea.vmem %s5, 2
  %v1517 = vld [vmem:[%s1516] sm:$0x1]
  %v1518 = vunpack.c.l.bf16 %v1517
  %v1519 = vperm.slane %v1518, 0
  %v1520 = vmul.f32 %v1513, %v1519
  %v1521 = vadd.f32 %v1497, %v1520
  %s1522 = scalar_lea.vmem %s4, 3
  %v1523 = vld [vmem:[%s1522] sm:$0x1]
  %v1525 = vsel %vm1452, %v1523, 0
  %1527 = vmatpush.bf16.msra.mxu0 0
  %1528 = vmatpush.bf16.msra.mxu0 0
  %1529 = vmatpush.bf16.msra.mxu0 0
  %1530 = vmatpush.bf16.msra.mxu0 0
  %1531 = vmatpush.bf16.msra.mxu0 0
  %1532 = vmatpush.bf16.msra.mxu0 0
  %1533 = vmatpush.bf16.msra.mxu0 %v1450
  %1534 = vmatpush.bf16.msra.mxu0 %v1449
  %1535 = vmatmul.bf16.gmra.mxu0 %v1525
  %v1536 = vpop.f32.mrf.mxu0
  %v1537 = vadd.f32 0.0, %v1536
  %v1538 = vpop.f32.mrf.mxu0
  %1539 = vdwg.mxu0
  %s1540 = scalar_lea.vmem %s5, 3
  %v1541 = vld [vmem:[%s1540] sm:$0x1]
  %v1542 = vunpack.c.l.bf16 %v1541
  %v1543 = vperm.slane %v1542, 0
  %v1544 = vmul.f32 %v1537, %v1543
  %v1545 = vadd.f32 %v1521, %v1544
  %s1546 = scalar_lea.vmem %s4, 4
  %v1547 = vld [vmem:[%s1546] sm:$0x1]
  %v1549 = vsel %vm1452, %v1547, 0
  %1551 = vmatpush.bf16.msra.mxu0 0
  %1552 = vmatpush.bf16.msra.mxu0 0
  %1553 = vmatpush.bf16.msra.mxu0 0
  %1554 = vmatpush.bf16.msra.mxu0 0
  %1555 = vmatpush.bf16.msra.mxu0 0
  %1556 = vmatpush.bf16.msra.mxu0 0
  %1557 = vmatpush.bf16.msra.mxu0 %v1450
  %1558 = vmatpush.bf16.msra.mxu0 %v1449
  %1559 = vmatmul.bf16.gmra.mxu0 %v1549
  %v1560 = vpop.f32.mrf.mxu0
  %v1561 = vadd.f32 0.0, %v1560
  %v1562 = vpop.f32.mrf.mxu0
  %1563 = vdwg.mxu0
  %s1564 = scalar_lea.vmem %s5, 4
  %v1565 = vld [vmem:[%s1564] sm:$0x1]
  %v1566 = vunpack.c.l.bf16 %v1565
  %v1567 = vperm.slane %v1566, 0
  %v1568 = vmul.f32 %v1561, %v1567
  %v1569 = vadd.f32 %v1545, %v1568
  %s1570 = scalar_lea.vmem %s4, 5
  %v1571 = vld [vmem:[%s1570] sm:$0x1]
  %v1573 = vsel %vm1452, %v1571, 0
  %1575 = vmatpush.bf16.msra.mxu0 0
  %1576 = vmatpush.bf16.msra.mxu0 0
  %1577 = vmatpush.bf16.msra.mxu0 0
  %1578 = vmatpush.bf16.msra.mxu0 0
  %1579 = vmatpush.bf16.msra.mxu0 0
  %1580 = vmatpush.bf16.msra.mxu0 0
  %1581 = vmatpush.bf16.msra.mxu0 %v1450
  %1582 = vmatpush.bf16.msra.mxu0 %v1449
  %1583 = vmatmul.bf16.gmra.mxu0 %v1573
  %v1584 = vpop.f32.mrf.mxu0
  %v1585 = vadd.f32 0.0, %v1584
  %v1586 = vpop.f32.mrf.mxu0
  %1587 = vdwg.mxu0
  %s1588 = scalar_lea.vmem %s5, 5
  %v1589 = vld [vmem:[%s1588] sm:$0x1]
  %v1590 = vunpack.c.l.bf16 %v1589
  %v1591 = vperm.slane %v1590, 0
  %v1592 = vmul.f32 %v1585, %v1591
  %v1593 = vadd.f32 %v1569, %v1592
  %s1594 = scalar_lea.vmem %s4, 6
  %v1595 = vld [vmem:[%s1594] sm:$0x1]
  %v1597 = vsel %vm1452, %v1595, 0
  %1599 = vmatpush.bf16.msra.mxu0 0
  %1600 = vmatpush.bf16.msra.mxu0 0
  %1601 = vmatpush.bf16.msra.mxu0 0
  %1602 = vmatpush.bf16.msra.mxu0 0
  %1603 = vmatpush.bf16.msra.mxu0 0
  %1604 = vmatpush.bf16.msra.mxu0 0
  %1605 = vmatpush.bf16.msra.mxu0 %v1450
  %1606 = vmatpush.bf16.msra.mxu0 %v1449
  %1607 = vmatmul.bf16.gmra.mxu0 %v1597
  %v1608 = vpop.f32.mrf.mxu0
  %v1609 = vadd.f32 0.0, %v1608
  %v1610 = vpop.f32.mrf.mxu0
  %1611 = vdwg.mxu0
  %s1612 = scalar_lea.vmem %s5, 6
  %v1613 = vld [vmem:[%s1612] sm:$0x1]
  %v1614 = vunpack.c.l.bf16 %v1613
  %v1615 = vperm.slane %v1614, 0
  %v1616 = vmul.f32 %v1609, %v1615
  %v1617 = vadd.f32 %v1593, %v1616
  %s1618 = scalar_lea.vmem %s4, 7
  %v1619 = vld [vmem:[%s1618] sm:$0x1]
  %v1621 = vsel %vm1452, %v1619, 0
  %1623 = vmatpush.bf16.msra.mxu0 0
  %1624 = vmatpush.bf16.msra.mxu0 0
  %1625 = vmatpush.bf16.msra.mxu0 0
  %1626 = vmatpush.bf16.msra.mxu0 0
  %1627 = vmatpush.bf16.msra.mxu0 0
  %1628 = vmatpush.bf16.msra.mxu0 0
  %1629 = vmatpush.bf16.msra.mxu0 %v1450
  %1630 = vmatpush.bf16.msra.mxu0 %v1449
  %1631 = vmatmul.bf16.gmra.mxu0 %v1621
  %v1632 = vpop.f32.mrf.mxu0
  %v1633 = vadd.f32 0.0, %v1632
  %v1634 = vpop.f32.mrf.mxu0
  %1635 = vdwg.mxu0
  %s1636 = scalar_lea.vmem %s5, 7
  %v1637 = vld [vmem:[%s1636] sm:$0x1]
  %v1638 = vunpack.c.l.bf16 %v1637
  %v1639 = vperm.slane %v1638, 0
  %v1640 = vmul.f32 %v1633, %v1639
  %v1641 = vadd.f32 %v1617, %v1640
  %s1642 = scalar_lea.vmem %s4, 8
  %v1643 = vld [vmem:[%s1642] sm:$0x1]
  %v1645 = vsel %vm1452, %v1643, 0
  %1647 = vmatpush.bf16.msra.mxu0 0
  %1648 = vmatpush.bf16.msra.mxu0 0
  %1649 = vmatpush.bf16.msra.mxu0 0
  %1650 = vmatpush.bf16.msra.mxu0 0
  %1651 = vmatpush.bf16.msra.mxu0 0
  %1652 = vmatpush.bf16.msra.mxu0 0
  %1653 = vmatpush.bf16.msra.mxu0 %v1450
  %1654 = vmatpush.bf16.msra.mxu0 %v1449
  %1655 = vmatmul.bf16.gmra.mxu0 %v1645
  %v1656 = vpop.f32.mrf.mxu0
  %v1657 = vadd.f32 0.0, %v1656
  %v1658 = vpop.f32.mrf.mxu0
  %1659 = vdwg.mxu0
  %s1660 = scalar_lea.vmem %s5, 8
  %v1661 = vld [vmem:[%s1660] sm:$0x1]
  %v1662 = vunpack.c.l.bf16 %v1661
  %v1663 = vperm.slane %v1662, 0
  %v1664 = vmul.f32 %v1657, %v1663
  %v1665 = vadd.f32 %v1641, %v1664
  %s1666 = scalar_lea.vmem %s4, 9
  %v1667 = vld [vmem:[%s1666] sm:$0x1]
  %v1669 = vsel %vm1452, %v1667, 0
  %1671 = vmatpush.bf16.msra.mxu0 0
  %1672 = vmatpush.bf16.msra.mxu0 0
  %1673 = vmatpush.bf16.msra.mxu0 0
  %1674 = vmatpush.bf16.msra.mxu0 0
  %1675 = vmatpush.bf16.msra.mxu0 0
  %1676 = vmatpush.bf16.msra.mxu0 0
  %1677 = vmatpush.bf16.msra.mxu0 %v1450
  %1678 = vmatpush.bf16.msra.mxu0 %v1449
  %1679 = vmatmul.bf16.gmra.mxu0 %v1669
  %v1680 = vpop.f32.mrf.mxu0
  %v1681 = vadd.f32 0.0, %v1680
  %v1682 = vpop.f32.mrf.mxu0
  %1683 = vdwg.mxu0
  %s1684 = scalar_lea.vmem %s5, 9
  %v1685 = vld [vmem:[%s1684] sm:$0x1]
  %v1686 = vunpack.c.l.bf16 %v1685
  %v1687 = vperm.slane %v1686, 0
  %v1688 = vmul.f32 %v1681, %v1687
  %v1689 = vadd.f32 %v1665, %v1688
  %s1690 = scalar_lea.vmem %s4, 10
  %v1691 = vld [vmem:[%s1690] sm:$0x1]
  %v1693 = vsel %vm1452, %v1691, 0
  %1695 = vmatpush.bf16.msra.mxu0 0
  %1696 = vmatpush.bf16.msra.mxu0 0
  %1697 = vmatpush.bf16.msra.mxu0 0
  %1698 = vmatpush.bf16.msra.mxu0 0
  %1699 = vmatpush.bf16.msra.mxu0 0
  %1700 = vmatpush.bf16.msra.mxu0 0
  %1701 = vmatpush.bf16.msra.mxu0 %v1450
  %1702 = vmatpush.bf16.msra.mxu0 %v1449
  %1703 = vmatmul.bf16.gmra.mxu0 %v1693
  %v1704 = vpop.f32.mrf.mxu0
  %v1705 = vadd.f32 0.0, %v1704
  %v1706 = vpop.f32.mrf.mxu0
  %1707 = vdwg.mxu0
  %s1708 = scalar_lea.vmem %s5, 10
  %v1709 = vld [vmem:[%s1708] sm:$0x1]
  %v1710 = vunpack.c.l.bf16 %v1709
  %v1711 = vperm.slane %v1710, 0
  %v1712 = vmul.f32 %v1705, %v1711
  %v1713 = vadd.f32 %v1689, %v1712
  %s1714 = scalar_lea.vmem %s4, 11
  %v1715 = vld [vmem:[%s1714] sm:$0x1]
  %v1717 = vsel %vm1452, %v1715, 0
  %1719 = vmatpush.bf16.msra.mxu0 0
  %1720 = vmatpush.bf16.msra.mxu0 0
  %1721 = vmatpush.bf16.msra.mxu0 0
  %1722 = vmatpush.bf16.msra.mxu0 0
  %1723 = vmatpush.bf16.msra.mxu0 0
  %1724 = vmatpush.bf16.msra.mxu0 0
  %1725 = vmatpush.bf16.msra.mxu0 %v1450
  %1726 = vmatpush.bf16.msra.mxu0 %v1449
  %1727 = vmatmul.bf16.gmra.mxu0 %v1717
  %v1728 = vpop.f32.mrf.mxu0
  %v1729 = vadd.f32 0.0, %v1728
  %v1730 = vpop.f32.mrf.mxu0
  %1731 = vdwg.mxu0
  %s1732 = scalar_lea.vmem %s5, 11
  %v1733 = vld [vmem:[%s1732] sm:$0x1]
  %v1734 = vunpack.c.l.bf16 %v1733
  %v1735 = vperm.slane %v1734, 0
  %v1736 = vmul.f32 %v1729, %v1735
  %v1737 = vadd.f32 %v1713, %v1736
  %s1738 = scalar_lea.vmem %s4, 12
  %v1739 = vld [vmem:[%s1738] sm:$0x1]
  %v1741 = vsel %vm1452, %v1739, 0
  %1743 = vmatpush.bf16.msra.mxu0 0
  %1744 = vmatpush.bf16.msra.mxu0 0
  %1745 = vmatpush.bf16.msra.mxu0 0
  %1746 = vmatpush.bf16.msra.mxu0 0
  %1747 = vmatpush.bf16.msra.mxu0 0
  %1748 = vmatpush.bf16.msra.mxu0 0
  %1749 = vmatpush.bf16.msra.mxu0 %v1450
  %1750 = vmatpush.bf16.msra.mxu0 %v1449
  %1751 = vmatmul.bf16.gmra.mxu0 %v1741
  %v1752 = vpop.f32.mrf.mxu0
  %v1753 = vadd.f32 0.0, %v1752
  %v1754 = vpop.f32.mrf.mxu0
  %1755 = vdwg.mxu0
  %s1756 = scalar_lea.vmem %s5, 12
  %v1757 = vld [vmem:[%s1756] sm:$0x1]
  %v1758 = vunpack.c.l.bf16 %v1757
  %v1759 = vperm.slane %v1758, 0
  %v1760 = vmul.f32 %v1753, %v1759
  %v1761 = vadd.f32 %v1737, %v1760
  %s1762 = scalar_lea.vmem %s4, 13
  %v1763 = vld [vmem:[%s1762] sm:$0x1]
  %v1765 = vsel %vm1452, %v1763, 0
  %1767 = vmatpush.bf16.msra.mxu0 0
  %1768 = vmatpush.bf16.msra.mxu0 0
  %1769 = vmatpush.bf16.msra.mxu0 0
  %1770 = vmatpush.bf16.msra.mxu0 0
  %1771 = vmatpush.bf16.msra.mxu0 0
  %1772 = vmatpush.bf16.msra.mxu0 0
  %1773 = vmatpush.bf16.msra.mxu0 %v1450
  %1774 = vmatpush.bf16.msra.mxu0 %v1449
  %1775 = vmatmul.bf16.gmra.mxu0 %v1765
  %v1776 = vpop.f32.mrf.mxu0
  %v1777 = vadd.f32 0.0, %v1776
  %v1778 = vpop.f32.mrf.mxu0
  %1779 = vdwg.mxu0
  %s1780 = scalar_lea.vmem %s5, 13
  %v1781 = vld [vmem:[%s1780] sm:$0x1]
  %v1782 = vunpack.c.l.bf16 %v1781
  %v1783 = vperm.slane %v1782, 0
  %v1784 = vmul.f32 %v1777, %v1783
  %v1785 = vadd.f32 %v1761, %v1784
  %s1786 = scalar_lea.vmem %s4, 14
  %v1787 = vld [vmem:[%s1786] sm:$0x1]
  %v1789 = vsel %vm1452, %v1787, 0
  %1791 = vmatpush.bf16.msra.mxu0 0
  %1792 = vmatpush.bf16.msra.mxu0 0
  %1793 = vmatpush.bf16.msra.mxu0 0
  %1794 = vmatpush.bf16.msra.mxu0 0
  %1795 = vmatpush.bf16.msra.mxu0 0
  %1796 = vmatpush.bf16.msra.mxu0 0
  %1797 = vmatpush.bf16.msra.mxu0 %v1450
  %1798 = vmatpush.bf16.msra.mxu0 %v1449
  %1799 = vmatmul.bf16.gmra.mxu0 %v1789
  %v1800 = vpop.f32.mrf.mxu0
  %v1801 = vadd.f32 0.0, %v1800
  %v1802 = vpop.f32.mrf.mxu0
  %1803 = vdwg.mxu0
  %s1804 = scalar_lea.vmem %s5, 14
  %v1805 = vld [vmem:[%s1804] sm:$0x1]
  %v1806 = vunpack.c.l.bf16 %v1805
  %v1807 = vperm.slane %v1806, 0
  %v1808 = vmul.f32 %v1801, %v1807
  %v1809 = vadd.f32 %v1785, %v1808
  %s1810 = scalar_lea.vmem %s4, 15
  %v1811 = vld [vmem:[%s1810] sm:$0x1]
  %v1813 = vsel %vm1452, %v1811, 0
  %1815 = vmatpush.bf16.msra.mxu0 0
  %1816 = vmatpush.bf16.msra.mxu0 0
  %1817 = vmatpush.bf16.msra.mxu0 0
  %1818 = vmatpush.bf16.msra.mxu0 0
  %1819 = vmatpush.bf16.msra.mxu0 0
  %1820 = vmatpush.bf16.msra.mxu0 0
  %1821 = vmatpush.bf16.msra.mxu0 %v1450
  %1822 = vmatpush.bf16.msra.mxu0 %v1449
  %1823 = vmatmul.bf16.gmra.mxu0 %v1813
  %v1824 = vpop.f32.mrf.mxu0
  %v1825 = vadd.f32 0.0, %v1824
  %v1826 = vpop.f32.mrf.mxu0
  %1827 = vdwg.mxu0
  %s1828 = scalar_lea.vmem %s5, 15
  %v1829 = vld [vmem:[%s1828] sm:$0x1]
  %v1830 = vunpack.c.l.bf16 %v1829
  %v1831 = vperm.slane %v1830, 0
  %v1832 = vmul.f32 %v1825, %v1831
  %v1833 = vadd.f32 %v1809, %v1832
  %vm1834 = vcmask 123904
  %v1835 = vsel %vm1834, %v1833, 0.0
  %1836 = vadd.xlane.f32.xlu0 %v1835
  %v1837 = vpop.xlane.xlu0 %1836
  %v1838 = vxor.u32 %v1837, 2147483648
  %v1839 = vmul.f32 %v1838, 1.442695
  %v1840 = vpow.pop %v1839
  %v1841 = vadd.f32 %v1840, 1.0
  %v1842 = vrcp.pop %v1841
  %v1843 = vmul.f32 %v1841, %v1842
  %v1844 = vsub.f32 1.0, %v1843
  %v1845 = vmul.f32 %v1842, %v1844
  %v1846 = vadd.f32 %v1842, %v1845
  %vm1847 = vweird.f32 %v1841
  %vm1848 = vweird.f32 %v1842
  %vm1849 = vmor %vm1847, %vm1848
  %v1850 = vsel %vm1849, %v1842, %v1846
  %v1851 = vand.u32 2147483647, %v1841
  %vm1852 = vcmp.eq.f32.partialorder %v1851, 8.507059e+37
  %v1853 = vand.u32 %v1841, 2147483648
  %v1854 = vor.u32 1.1754944e-38, %v1853
  %v1855 = vsel %vm1852, %v1854, %v1850
  %v1856 = vmul.f32 1.0, %v1855
  %vm1857 = vcmask 1024
  %1858 = vst.msk [vmem:[%s6] sm:$0x3] %vm1857, %v1856
  // Predicated region
  $region26: #{forward.1} parent=0 // pred_check
    _
  $region27: #{forward.1} parent=0 // pred_check_branch
    %1860 = sbr.rel (0) target = $region29
  $region28: #{forward.1} parent=0 // pred_region
    _
  $region29: #{forward.1} parent=0 // pred_fallthru
    _
  // Predicated region
  $region30: #{forward.1} parent=0 // pred_check
    _
  $region31: #{forward.1} parent=0 // pred_check_branch
    %1862 = sbr.rel (0) target = $region33
  $region32: #{forward.1} parent=0 // pred_region
    _
  $region33: #{forward.1} parent=0 // pred_fallthru
    _

</llo_original>
